<compile_context>
chip_gen: v7x
topology: tpu7x:2x2x1
jax: 0.10.0
libtpu: 0.0.40
codegen_flags: <defaults>
</compile_context>

<pallas_src>
import functools

import jax
import jax.numpy as jnp
from jax import lax
from jax.experimental import pallas as pl
from jax.experimental.pallas import tpu as pltpu


def _round_up(n, m):
    return ((n + m - 1) // m) * m


def _make_lstm_kernel(seq_len, block_t, needs_mask):
    def kernel(xproj_ref, whh_ref, fcw_ref, fcb_ref, out_ref, h_scr, c_scr):
        # xproj_ref: (Tb, Bp, 4Hp) mm_dtype   x_t @ W_ih^T + b, gates [i,f,o,g]
        # whh_ref:   (Hp, 4Hp)     mm_dtype   W_hh^T, gates [i,f,o,g], zero-padded
        # fcw_ref:   (Hp, Op)      mm_dtype   fc weight^T, zero-padded
        # fcb_ref:   (1, Op)       f32
        # out_ref:   (Bp, Op)      f32        written only on the last grid step
        # h_scr/c_scr: (Bp, Hp)    f32        recurrent state, persists across grid
        tb = pl.program_id(0)
        n_tb = pl.num_programs(0)
        Hp = whh_ref.shape[0]

        @pl.when(tb == 0)
        def _():
            h_scr[...] = jnp.zeros_like(h_scr)
            c_scr[...] = jnp.zeros_like(c_scr)

        whh = whh_ref[...]  # load the resident weight once per grid step

        def step(lt, carry):
            h, c = carry
            gates = (
                xproj_ref[lt].astype(jnp.float32)
                + jnp.dot(h.astype(whh.dtype), whh,
                          preferred_element_type=jnp.float32)
            )  # (Bp, 4Hp) f32
            # Gate columns are [i | f | o | g], each Hp (multiple of 128) lanes
            # wide: one lane-dense sigmoid for i/f/o, one tanh for g.
            # TODO(synk): on v6e/v7x, evaluate bf16 nonlinearities (EUP bf16
            # path) if profiling shows the EUP slot binds for small Hp.
            sig = jax.nn.sigmoid(gates[:, : 3 * Hp])
            i_g = sig[:, 0 * Hp:1 * Hp]
            f_g = sig[:, 1 * Hp:2 * Hp]
            o_g = sig[:, 2 * Hp:3 * Hp]
            g_g = jnp.tanh(gates[:, 3 * Hp:4 * Hp])
            c_new = f_g * c + i_g * g_g
            h_new = o_g * jnp.tanh(c_new)
            if needs_mask:
                # Padded tail timesteps: freeze the state at t = seq_len - 1.
                valid = (tb * block_t + lt) < seq_len
                c_new = jnp.where(valid, c_new, c)
                h_new = jnp.where(valid, h_new, h)
            return h_new, c_new

        h, c = lax.fori_loop(0, block_t, step, (h_scr[...], c_scr[...]),
                             unroll=True)
        h_scr[...] = h
        c_scr[...] = c

        @pl.when(tb == n_tb - 1)
        def _():
            out_ref[...] = (
                jnp.dot(h.astype(fcw_ref.dtype), fcw_ref[...],
                        preferred_element_type=jnp.float32)
                + fcb_ref[...]
            ).astype(out_ref.dtype)

    return kernel


def simple_lstm_forward(x, params, *, mm_dtype=jnp.bfloat16, block_t=16):
    """x: (B, T, I) float32, batch_first (PyTorch convention). Returns (B, O)."""
    B, T, I = x.shape
    w_ih, w_hh = params["w_ih"], params["w_hh"]
    b_ih, b_hh = params["b_ih"], params["b_hh"]
    fc_w, fc_b = params["fc_w"], params["fc_b"]
    H = w_hh.shape[1]
    O = fc_w.shape[0]

    itemsize = jnp.dtype(mm_dtype).itemsize
    sub = 8 * (4 // itemsize)            # packed sublane rows: 8 (f32) / 16 (bf16)
    Bp = _round_up(max(B, sub), sub)     # sublane alignment for the mm dtype
    Hp = _round_up(H, 128)               # lane alignment per gate block
    Op = _round_up(O, 128)               # lane-dense output store
    Tb = max(1, min(int(block_t), T))    # timesteps per grid step
    Tp = _round_up(T, Tb)
    needs_mask = Tp != T

    # --- reorder gate blocks [i,f,g,o] -> [i,f,o,g] and zero-pad H -> Hp ---
    def reorder_pad_rows(w):             # (4H, X) -> (4Hp, X)
        blocks = (w[0 * H:1 * H], w[1 * H:2 * H], w[3 * H:4 * H], w[2 * H:3 * H])
        out = jnp.zeros((4 * Hp, w.shape[1]), w.dtype)
        for k, blk in enumerate(blocks):
            out = out.at[k * Hp:k * Hp + H].set(blk)
        return out

    def reorder_pad_vec(v):              # (4H,) -> (4Hp,)
        blocks = (v[0 * H:1 * H], v[1 * H:2 * H], v[3 * H:4 * H], v[2 * H:3 * H])
        out = jnp.zeros((4 * Hp,), v.dtype)
        for k, blk in enumerate(blocks):
            out = out.at[k * Hp:k * Hp + H].set(blk)
        return out

    wih_rp = reorder_pad_rows(w_ih)                  # (4Hp, I)
    whh_rp = reorder_pad_rows(w_hh)                  # (4Hp, H)
    b_rp = reorder_pad_vec(b_ih + b_hh)              # (4Hp,)

    # Hoisted input projection as one big bf16-operand matmul (f32 accumulate),
    # written directly in mm_dtype, time-major so the kernel streams
    # (Tb, Bp, 4Hp) slabs.
    # TODO(synk): on v5e with 4H >> I, fuse this projection into the kernel
    # (stream raw x_t and do [x_t | h] @ [W_ih^T ; W_hh^T]) to cut HBM traffic.
    xproj = (
        jnp.einsum("bti,gi->tbg", x.astype(mm_dtype), wih_rp.astype(mm_dtype),
                   preferred_element_type=jnp.float32)
        + b_rp
    ).astype(mm_dtype)                               # (T, B, 4Hp)
    xproj = jnp.pad(xproj, ((0, Tp - T), (0, Bp - B), (0, 0)))

    whh_t = (jnp.zeros((Hp, 4 * Hp), jnp.float32).at[:H, :].set(whh_rp.T)
             .astype(mm_dtype))
    fcw_t = (jnp.zeros((Hp, Op), jnp.float32).at[:H, :O].set(fc_w.T)
             .astype(mm_dtype))
    fcb_p = jnp.zeros((1, Op), jnp.float32).at[0, :O].set(fc_b)

    # VMEM accounting matching the real buffering: only the streamed xproj slab
    # is double-buffered; weights/bias are Buffered(1); output + scratch are
    # single resident copies.  Clamp to physical VMEM (64 MiB on v7x).
    vmem_need = (
        2 * Tb * Bp * 4 * Hp * itemsize   # streamed xproj slab (double-buffered)
        + Hp * 4 * Hp * itemsize          # W_hh^T        (Buffered(1))
        + Hp * Op * itemsize              # fc_W^T        (Buffered(1))
        + 8 * Op * 4                      # fc bias tile  (Buffered(1))
        + Bp * Op * 4                     # resident output block
        + 2 * Bp * Hp * 4                 # h/c scratch
    )
    try:
        vmem_cap = pltpu.get_tpu_info().vmem_capacity_bytes
    except Exception:  # pragma: no cover - conservative fallback
        vmem_cap = 64 << 20
    vmem_bytes = min(max(vmem_need + (2 << 20), 8 << 20), int(0.9 * vmem_cap))

    cost = pl.CostEstimate(
        flops=int(2 * T * Bp * Hp * 4 * Hp + 2 * Bp * Hp * Op),
        transcendentals=int(5 * T * Bp * Hp),
        bytes_accessed=int(xproj.size * itemsize + whh_t.size * itemsize
                           + fcw_t.size * itemsize + fcb_p.size * 4
                           + Bp * Op * 4),
    )

    kernel = _make_lstm_kernel(T, Tb, needs_mask)

    # TODO(synk): on v7x with large B (>~512 rows), add a leading "parallel"
    # batch-tile grid axis so the 2 TensorCores each run a batch shard; at the
    # small B here it would only add overhead.
    # TODO(synk): for very large H (Hp >= ~2K) on v7x, additionally tile the
    # 4Hp gate dimension over an inner "arbitrary" axis to fit 64 MiB VMEM.
    out_padded = pl.pallas_call(
        kernel,
        out_shape=jax.ShapeDtypeStruct((Bp, Op), jnp.float32),
        grid_spec=pltpu.PrefetchScalarGridSpec(
            num_scalar_prefetch=0,
            grid=(Tp // Tb,),
            in_specs=[
                pl.BlockSpec((Tb, Bp, 4 * Hp), lambda t: (t, 0, 0)),
                pl.BlockSpec((Hp, 4 * Hp), lambda t: (0, 0),
                             pipeline_mode=pl.Buffered(1)),
                pl.BlockSpec((Hp, Op), lambda t: (0, 0),
                             pipeline_mode=pl.Buffered(1)),
                pl.BlockSpec((1, Op), lambda t: (0, 0),
                             pipeline_mode=pl.Buffered(1)),
            ],
            out_specs=pl.BlockSpec((Bp, Op), lambda t: (0, 0)),
            scratch_shapes=[pltpu.VMEM((Bp, Hp), jnp.float32),
                            pltpu.VMEM((Bp, Hp), jnp.float32)],
        ),
        compiler_params=pltpu.CompilerParams(
            dimension_semantics=("arbitrary",),
            vmem_limit_bytes=vmem_bytes,
        ),
        cost_estimate=cost,
    )(xproj, whh_t, fcw_t, fcb_p)

    return out_padded[:B, :O]


def init_params(key, input_size, hidden_size, output_size):
    """Deterministic init mirroring PyTorch nn.LSTM / nn.Linear shapes."""
    k = 1.0 / jnp.sqrt(hidden_size)
    keys = jax.random.split(key, 6)
    w_ih = jax.random.uniform(keys[0], (4 * hidden_size, input_size),
                              jnp.float32, -k, k)
    w_hh = jax.random.uniform(keys[1], (4 * hidden_size, hidden_size),
                              jnp.float32, -k, k)
    b_ih = jax.random.uniform(keys[2], (4 * hidden_size,), jnp.float32, -k, k)
    b_hh = jax.random.uniform(keys[3], (4 * hidden_size,), jnp.float32, -k, k)
    fc_w = jax.random.uniform(keys[4], (output_size, hidden_size),
                              jnp.float32, -k, k)
    fc_b = jax.random.uniform(keys[5], (output_size,), jnp.float32, -k, k)
    return dict(w_ih=w_ih, w_hh=w_hh, b_ih=b_ih, b_hh=b_hh,
                fc_w=fc_w, fc_b=fc_b)


def reference_forward(x, params):
    """Pure-JAX f32 reference (PyTorch LSTM semantics, gate order [i,f,g,o])."""
    B, T, I = x.shape
    H = params["w_hh"].shape[1]
    h = jnp.zeros((B, H), jnp.float32)
    c = jnp.zeros((B, H), jnp.float32)
    for t in range(T):
        gates = (x[:, t, :] @ params["w_ih"].T + params["b_ih"]
                 + h @ params["w_hh"].T + params["b_hh"])
        i_g = jax.nn.sigmoid(gates[:, 0 * H:1 * H])
        f_g = jax.nn.sigmoid(gates[:, 1 * H:2 * H])
        g_g = jnp.tanh(gates[:, 2 * H:3 * H])
        o_g = jax.nn.sigmoid(gates[:, 3 * H:4 * H])
        c = f_g * c + i_g * g_g
        h = o_g * jnp.tanh(c)
    return h @ params["fc_w"].T + params["fc_b"]


if __name__ == "__main__":
    B, T, I, H, O = 2, 8, 16, 32, 8
    key = jax.random.PRNGKey(0)
    kx, kp = jax.random.split(key)
    x = jax.random.normal(kx, (B, T, I), jnp.float32)
    params = init_params(kp, I, H, O)

    ref = reference_forward(x, params)

    # f32 matmul path, whole sequence in one grid step: tight structural check.
    out_f32 = jax.block_until_ready(
        simple_lstm_forward(x, params, mm_dtype=jnp.float32))
    assert out_f32.shape == (B, O)
    assert jnp.allclose(out_f32, ref, atol=1e-4, rtol=1e-4)

    # f32 path with a block size that does NOT divide T: exercises the padded
    # tail-timestep masking.
    out_f32_tail = jax.block_until_ready(
        simple_lstm_forward(x, params, mm_dtype=jnp.float32, block_t=3))
    assert jnp.allclose(out_f32_tail, ref, atol=1e-4, rtol=1e-4)

    # bf16 matmul-operand path (v6e/v7x-friendly): loosened tolerance.
    out_bf16 = jax.block_until_ready(
        simple_lstm_forward(x, params, mm_dtype=jnp.bfloat16))
    assert out_bf16.shape == (B, O)
    assert jnp.allclose(out_bf16, ref, atol=5e-2, rtol=5e-2)

    print("KERNEL_OK")
</pallas_src>

<mosaic_0001>
module attributes {stable_mosaic.version = 11 : i64} {
  func.func @kernel(%arg0: i32, %arg1: memref<8x8x512xf32, #tpu.memory_space<vmem>>, %arg2: memref<128x512xf32, #tpu.memory_space<vmem>>, %arg3: memref<128x128xf32, #tpu.memory_space<vmem>>, %arg4: memref<1x128xf32, #tpu.memory_space<vmem>>, %arg5: memref<8x128xf32, #tpu.memory_space<vmem>>, %arg6: memref<8x128xf32, #tpu.memory_space<vmem>>, %arg7: memref<8x128xf32, #tpu.memory_space<vmem>>) attributes {dimension_semantics = [#tpu.dimension_semantics<arbitrary>], iteration_bounds = array<i64: 1>, scalar_prefetch = 0 : i64, scratch_operands = 2 : i64, tpu.core_type = #tpu.core_type<tc>, window_params = [{transform_indices = @transform_0, window_bounds = array<i64: 8, 8, 512>}, {pipeline_mode = #tpu.pipeline_mode<synchronous>, transform_indices = @transform_1, window_bounds = array<i64: 128, 512>}, {pipeline_mode = #tpu.pipeline_mode<synchronous>, transform_indices = @transform_2, window_bounds = array<i64: 128, 128>}, {pipeline_mode = #tpu.pipeline_mode<synchronous>, transform_indices = @transform_3, window_bounds = array<i64: 1, 128>}, {pipeline_mode = #tpu.pipeline_mode<synchronous>, transform_indices = @transform_4, window_bounds = array<i64: 8, 128>}]} {
    %c0_i32 = arith.constant 0 : i32
    %0 = arith.cmpi eq, %arg0, %c0_i32 : i32
    %1 = arith.extui %0 : i1 to i32
    %c0_i32_0 = arith.constant 0 : i32
    %2 = arith.cmpi ne, %1, %c0_i32_0 : i32
    scf.if %2 {
      %cst_44 = arith.constant 0.000000e+00 : f32
      %179 = vector.broadcast %cst_44 : f32 to vector<8x128xf32>
      %c0_45 = arith.constant 0 : index
      %c0_46 = arith.constant 0 : index
      %180 = vector.load %arg6[%c0_45, %c0_46] : memref<8x128xf32, #tpu.memory_space<vmem>>, vector<8x128xf32>
      tpu.vector_store %arg6[%c0_45, %c0_46], %179 {strides = array<i32>} : memref<8x128xf32, #tpu.memory_space<vmem>>, vector<8x128xf32>,
      %cst_47 = arith.constant 0.000000e+00 : f32
      %181 = vector.broadcast %cst_47 : f32 to vector<8x128xf32>
      %c0_48 = arith.constant 0 : index
      %c0_49 = arith.constant 0 : index
      %182 = vector.load %arg7[%c0_48, %c0_49] : memref<8x128xf32, #tpu.memory_space<vmem>>, vector<8x128xf32>
      tpu.vector_store %arg7[%c0_48, %c0_49], %181 {strides = array<i32>} : memref<8x128xf32, #tpu.memory_space<vmem>>, vector<8x128xf32>,
    } else {
    }
    %c0 = arith.constant 0 : index
    %c0_1 = arith.constant 0 : index
    %3 = vector.load %arg2[%c0, %c0_1] : memref<128x512xf32, #tpu.memory_space<vmem>>, vector<128x512xf32>
    %c0_2 = arith.constant 0 : index
    %c0_3 = arith.constant 0 : index
    %4 = vector.load %arg6[%c0_2, %c0_3] : memref<8x128xf32, #tpu.memory_space<vmem>>, vector<8x128xf32>
    %c0_4 = arith.constant 0 : index
    %c0_5 = arith.constant 0 : index
    %5 = vector.load %arg7[%c0_4, %c0_5] : memref<8x128xf32, #tpu.memory_space<vmem>>, vector<8x128xf32>
    %c0_i32_6 = arith.constant 0 : i32
    %6 = arith.index_cast %c0_i32_6 : i32 to index
    %c0_7 = arith.constant 0 : index
    %c0_8 = arith.constant 0 : index
    %7 = vector.load %arg1[%6, %c0_7, %c0_8] : memref<8x8x512xf32, #tpu.memory_space<vmem>>, vector<1x8x512xf32>
    %8 = vector.shape_cast %7 : vector<1x8x512xf32> to vector<8x512xf32>
    %cst = arith.constant dense<0.000000e+00> : vector<8x512xf32>
    %9 = tpu.matmul %4, %3, %cst {dimension_numbers = #tpu.dot_dimension_numbers<[1], [0], [0], [1], [0, 0, 1, 1], [], []>} : vector<8x128xf32>, vector<128x512xf32>, vector<8x512xf32> -> vector<8x512xf32>
    %10 = arith.addf %8, %9 : vector<8x512xf32>
    %11 = vector.extract_strided_slice %10 {offsets = [0, 0], sizes = [8, 384], strides = [1, 1]} : vector<8x512xf32> to vector<8x384xf32>
    %12 = arith.negf %11 : vector<8x384xf32>
    %13 = math.exp %12 : vector<8x384xf32>
    %cst_9 = arith.constant 1.000000e+00 : f32
    %14 = vector.broadcast %cst_9 : f32 to vector<8x384xf32>
    %15 = arith.addf %14, %13 : vector<8x384xf32>
    %16 = arith.divf %14, %15 : vector<8x384xf32>
    %17 = vector.extract_strided_slice %16 {offsets = [0, 0], sizes = [8, 128], strides = [1, 1]} : vector<8x384xf32> to vector<8x128xf32>
    %18 = vector.extract_strided_slice %16 {offsets = [0, 128], sizes = [8, 128], strides = [1, 1]} : vector<8x384xf32> to vector<8x128xf32>
    %19 = vector.extract_strided_slice %16 {offsets = [0, 256], sizes = [8, 128], strides = [1, 1]} : vector<8x384xf32> to vector<8x128xf32>
    %20 = vector.extract_strided_slice %10 {offsets = [0, 384], sizes = [8, 128], strides = [1, 1]} : vector<8x512xf32> to vector<8x128xf32>
    %21 = math.tanh %20 : vector<8x128xf32>
    %22 = arith.mulf %18, %5 : vector<8x128xf32>
    %23 = arith.mulf %17, %21 : vector<8x128xf32>
    %24 = arith.addf %22, %23 : vector<8x128xf32>
    %25 = math.tanh %24 : vector<8x128xf32>
    %26 = arith.mulf %19, %25 : vector<8x128xf32>
    %c1_i32 = arith.constant 1 : i32
    %27 = arith.index_cast %c1_i32 : i32 to index
    %c0_10 = arith.constant 0 : index
    %c0_11 = arith.constant 0 : index
    %28 = vector.load %arg1[%27, %c0_10, %c0_11] : memref<8x8x512xf32, #tpu.memory_space<vmem>>, vector<1x8x512xf32>
    %29 = vector.shape_cast %28 : vector<1x8x512xf32> to vector<8x512xf32>
    %cst_12 = arith.constant dense<0.000000e+00> : vector<8x512xf32>
    %30 = tpu.matmul %26, %3, %cst_12 {dimension_numbers = #tpu.dot_dimension_numbers<[1], [0], [0], [1], [0, 0, 1, 1], [], []>} : vector<8x128xf32>, vector<128x512xf32>, vector<8x512xf32> -> vector<8x512xf32>
    %31 = arith.addf %29, %30 : vector<8x512xf32>
    %32 = vector.extract_strided_slice %31 {offsets = [0, 0], sizes = [8, 384], strides = [1, 1]} : vector<8x512xf32> to vector<8x384xf32>
    %33 = arith.negf %32 : vector<8x384xf32>
    %34 = math.exp %33 : vector<8x384xf32>
    %cst_13 = arith.constant 1.000000e+00 : f32
    %35 = vector.broadcast %cst_13 : f32 to vector<8x384xf32>
    %36 = arith.addf %35, %34 : vector<8x384xf32>
    %37 = arith.divf %35, %36 : vector<8x384xf32>
    %38 = vector.extract_strided_slice %37 {offsets = [0, 0], sizes = [8, 128], strides = [1, 1]} : vector<8x384xf32> to vector<8x128xf32>
    %39 = vector.extract_strided_slice %37 {offsets = [0, 128], sizes = [8, 128], strides = [1, 1]} : vector<8x384xf32> to vector<8x128xf32>
    %40 = vector.extract_strided_slice %37 {offsets = [0, 256], sizes = [8, 128], strides = [1, 1]} : vector<8x384xf32> to vector<8x128xf32>
    %41 = vector.extract_strided_slice %31 {offsets = [0, 384], sizes = [8, 128], strides = [1, 1]} : vector<8x512xf32> to vector<8x128xf32>
    %42 = math.tanh %41 : vector<8x128xf32>
    %43 = arith.mulf %39, %24 : vector<8x128xf32>
    %44 = arith.mulf %38, %42 : vector<8x128xf32>
    %45 = arith.addf %43, %44 : vector<8x128xf32>
    %46 = math.tanh %45 : vector<8x128xf32>
    %47 = arith.mulf %40, %46 : vector<8x128xf32>
    %c2_i32 = arith.constant 2 : i32
    %48 = arith.index_cast %c2_i32 : i32 to index
    %c0_14 = arith.constant 0 : index
    %c0_15 = arith.constant 0 : index
    %49 = vector.load %arg1[%48, %c0_14, %c0_15] : memref<8x8x512xf32, #tpu.memory_space<vmem>>, vector<1x8x512xf32>
    %50 = vector.shape_cast %49 : vector<1x8x512xf32> to vector<8x512xf32>
    %cst_16 = arith.constant dense<0.000000e+00> : vector<8x512xf32>
    %51 = tpu.matmul %47, %3, %cst_16 {dimension_numbers = #tpu.dot_dimension_numbers<[1], [0], [0], [1], [0, 0, 1, 1], [], []>} : vector<8x128xf32>, vector<128x512xf32>, vector<8x512xf32> -> vector<8x512xf32>
    %52 = arith.addf %50, %51 : vector<8x512xf32>
    %53 = vector.extract_strided_slice %52 {offsets = [0, 0], sizes = [8, 384], strides = [1, 1]} : vector<8x512xf32> to vector<8x384xf32>
    %54 = arith.negf %53 : vector<8x384xf32>
    %55 = math.exp %54 : vector<8x384xf32>
    %cst_17 = arith.constant 1.000000e+00 : f32
    %56 = vector.broadcast %cst_17 : f32 to vector<8x384xf32>
    %57 = arith.addf %56, %55 : vector<8x384xf32>
    %58 = arith.divf %56, %57 : vector<8x384xf32>
    %59 = vector.extract_strided_slice %58 {offsets = [0, 0], sizes = [8, 128], strides = [1, 1]} : vector<8x384xf32> to vector<8x128xf32>
    %60 = vector.extract_strided_slice %58 {offsets = [0, 128], sizes = [8, 128], strides = [1, 1]} : vector<8x384xf32> to vector<8x128xf32>
    %61 = vector.extract_strided_slice %58 {offsets = [0, 256], sizes = [8, 128], strides = [1, 1]} : vector<8x384xf32> to vector<8x128xf32>
    %62 = vector.extract_strided_slice %52 {offsets = [0, 384], sizes = [8, 128], strides = [1, 1]} : vector<8x512xf32> to vector<8x128xf32>
    %63 = math.tanh %62 : vector<8x128xf32>
    %64 = arith.mulf %60, %45 : vector<8x128xf32>
    %65 = arith.mulf %59, %63 : vector<8x128xf32>
    %66 = arith.addf %64, %65 : vector<8x128xf32>
    %67 = math.tanh %66 : vector<8x128xf32>
    %68 = arith.mulf %61, %67 : vector<8x128xf32>
    %c3_i32 = arith.constant 3 : i32
    %69 = arith.index_cast %c3_i32 : i32 to index
    %c0_18 = arith.constant 0 : index
    %c0_19 = arith.constant 0 : index
    %70 = vector.load %arg1[%69, %c0_18, %c0_19] : memref<8x8x512xf32, #tpu.memory_space<vmem>>, vector<1x8x512xf32>
    %71 = vector.shape_cast %70 : vector<1x8x512xf32> to vector<8x512xf32>
    %cst_20 = arith.constant dense<0.000000e+00> : vector<8x512xf32>
    %72 = tpu.matmul %68, %3, %cst_20 {dimension_numbers = #tpu.dot_dimension_numbers<[1], [0], [0], [1], [0, 0, 1, 1], [], []>} : vector<8x128xf32>, vector<128x512xf32>, vector<8x512xf32> -> vector<8x512xf32>
    %73 = arith.addf %71, %72 : vector<8x512xf32>
    %74 = vector.extract_strided_slice %73 {offsets = [0, 0], sizes = [8, 384], strides = [1, 1]} : vector<8x512xf32> to vector<8x384xf32>
    %75 = arith.negf %74 : vector<8x384xf32>
    %76 = math.exp %75 : vector<8x384xf32>
    %cst_21 = arith.constant 1.000000e+00 : f32
    %77 = vector.broadcast %cst_21 : f32 to vector<8x384xf32>
    %78 = arith.addf %77, %76 : vector<8x384xf32>
    %79 = arith.divf %77, %78 : vector<8x384xf32>
    %80 = vector.extract_strided_slice %79 {offsets = [0, 0], sizes = [8, 128], strides = [1, 1]} : vector<8x384xf32> to vector<8x128xf32>
    %81 = vector.extract_strided_slice %79 {offsets = [0, 128], sizes = [8, 128], strides = [1, 1]} : vector<8x384xf32> to vector<8x128xf32>
    %82 = vector.extract_strided_slice %79 {offsets = [0, 256], sizes = [8, 128], strides = [1, 1]} : vector<8x384xf32> to vector<8x128xf32>
    %83 = vector.extract_strided_slice %73 {offsets = [0, 384], sizes = [8, 128], strides = [1, 1]} : vector<8x512xf32> to vector<8x128xf32>
    %84 = math.tanh %83 : vector<8x128xf32>
    %85 = arith.mulf %81, %66 : vector<8x128xf32>
    %86 = arith.mulf %80, %84 : vector<8x128xf32>
    %87 = arith.addf %85, %86 : vector<8x128xf32>
    %88 = math.tanh %87 : vector<8x128xf32>
    %89 = arith.mulf %82, %88 : vector<8x128xf32>
    %c4_i32 = arith.constant 4 : i32
    %90 = arith.index_cast %c4_i32 : i32 to index
    %c0_22 = arith.constant 0 : index
    %c0_23 = arith.constant 0 : index
    %91 = vector.load %arg1[%90, %c0_22, %c0_23] : memref<8x8x512xf32, #tpu.memory_space<vmem>>, vector<1x8x512xf32>
    %92 = vector.shape_cast %91 : vector<1x8x512xf32> to vector<8x512xf32>
    %cst_24 = arith.constant dense<0.000000e+00> : vector<8x512xf32>
    %93 = tpu.matmul %89, %3, %cst_24 {dimension_numbers = #tpu.dot_dimension_numbers<[1], [0], [0], [1], [0, 0, 1, 1], [], []>} : vector<8x128xf32>, vector<128x512xf32>, vector<8x512xf32> -> vector<8x512xf32>
    %94 = arith.addf %92, %93 : vector<8x512xf32>
    %95 = vector.extract_strided_slice %94 {offsets = [0, 0], sizes = [8, 384], strides = [1, 1]} : vector<8x512xf32> to vector<8x384xf32>
    %96 = arith.negf %95 : vector<8x384xf32>
    %97 = math.exp %96 : vector<8x384xf32>
    %cst_25 = arith.constant 1.000000e+00 : f32
    %98 = vector.broadcast %cst_25 : f32 to vector<8x384xf32>
    %99 = arith.addf %98, %97 : vector<8x384xf32>
    %100 = arith.divf %98, %99 : vector<8x384xf32>
    %101 = vector.extract_strided_slice %100 {offsets = [0, 0], sizes = [8, 128], strides = [1, 1]} : vector<8x384xf32> to vector<8x128xf32>
    %102 = vector.extract_strided_slice %100 {offsets = [0, 128], sizes = [8, 128], strides = [1, 1]} : vector<8x384xf32> to vector<8x128xf32>
    %103 = vector.extract_strided_slice %100 {offsets = [0, 256], sizes = [8, 128], strides = [1, 1]} : vector<8x384xf32> to vector<8x128xf32>
    %104 = vector.extract_strided_slice %94 {offsets = [0, 384], sizes = [8, 128], strides = [1, 1]} : vector<8x512xf32> to vector<8x128xf32>
    %105 = math.tanh %104 : vector<8x128xf32>
    %106 = arith.mulf %102, %87 : vector<8x128xf32>
    %107 = arith.mulf %101, %105 : vector<8x128xf32>
    %108 = arith.addf %106, %107 : vector<8x128xf32>
    %109 = math.tanh %108 : vector<8x128xf32>
    %110 = arith.mulf %103, %109 : vector<8x128xf32>
    %c5_i32 = arith.constant 5 : i32
    %111 = arith.index_cast %c5_i32 : i32 to index
    %c0_26 = arith.constant 0 : index
    %c0_27 = arith.constant 0 : index
    %112 = vector.load %arg1[%111, %c0_26, %c0_27] : memref<8x8x512xf32, #tpu.memory_space<vmem>>, vector<1x8x512xf32>
    %113 = vector.shape_cast %112 : vector<1x8x512xf32> to vector<8x512xf32>
    %cst_28 = arith.constant dense<0.000000e+00> : vector<8x512xf32>
    %114 = tpu.matmul %110, %3, %cst_28 {dimension_numbers = #tpu.dot_dimension_numbers<[1], [0], [0], [1], [0, 0, 1, 1], [], []>} : vector<8x128xf32>, vector<128x512xf32>, vector<8x512xf32> -> vector<8x512xf32>
    %115 = arith.addf %113, %114 : vector<8x512xf32>
    %116 = vector.extract_strided_slice %115 {offsets = [0, 0], sizes = [8, 384], strides = [1, 1]} : vector<8x512xf32> to vector<8x384xf32>
    %117 = arith.negf %116 : vector<8x384xf32>
    %118 = math.exp %117 : vector<8x384xf32>
    %cst_29 = arith.constant 1.000000e+00 : f32
    %119 = vector.broadcast %cst_29 : f32 to vector<8x384xf32>
    %120 = arith.addf %119, %118 : vector<8x384xf32>
    %121 = arith.divf %119, %120 : vector<8x384xf32>
    %122 = vector.extract_strided_slice %121 {offsets = [0, 0], sizes = [8, 128], strides = [1, 1]} : vector<8x384xf32> to vector<8x128xf32>
    %123 = vector.extract_strided_slice %121 {offsets = [0, 128], sizes = [8, 128], strides = [1, 1]} : vector<8x384xf32> to vector<8x128xf32>
    %124 = vector.extract_strided_slice %121 {offsets = [0, 256], sizes = [8, 128], strides = [1, 1]} : vector<8x384xf32> to vector<8x128xf32>
    %125 = vector.extract_strided_slice %115 {offsets = [0, 384], sizes = [8, 128], strides = [1, 1]} : vector<8x512xf32> to vector<8x128xf32>
    %126 = math.tanh %125 : vector<8x128xf32>
    %127 = arith.mulf %123, %108 : vector<8x128xf32>
    %128 = arith.mulf %122, %126 : vector<8x128xf32>
    %129 = arith.addf %127, %128 : vector<8x128xf32>
    %130 = math.tanh %129 : vector<8x128xf32>
    %131 = arith.mulf %124, %130 : vector<8x128xf32>
    %c6_i32 = arith.constant 6 : i32
    %132 = arith.index_cast %c6_i32 : i32 to index
    %c0_30 = arith.constant 0 : index
    %c0_31 = arith.constant 0 : index
    %133 = vector.load %arg1[%132, %c0_30, %c0_31] : memref<8x8x512xf32, #tpu.memory_space<vmem>>, vector<1x8x512xf32>
    %134 = vector.shape_cast %133 : vector<1x8x512xf32> to vector<8x512xf32>
    %cst_32 = arith.constant dense<0.000000e+00> : vector<8x512xf32>
    %135 = tpu.matmul %131, %3, %cst_32 {dimension_numbers = #tpu.dot_dimension_numbers<[1], [0], [0], [1], [0, 0, 1, 1], [], []>} : vector<8x128xf32>, vector<128x512xf32>, vector<8x512xf32> -> vector<8x512xf32>
    %136 = arith.addf %134, %135 : vector<8x512xf32>
    %137 = vector.extract_strided_slice %136 {offsets = [0, 0], sizes = [8, 384], strides = [1, 1]} : vector<8x512xf32> to vector<8x384xf32>
    %138 = arith.negf %137 : vector<8x384xf32>
    %139 = math.exp %138 : vector<8x384xf32>
    %cst_33 = arith.constant 1.000000e+00 : f32
    %140 = vector.broadcast %cst_33 : f32 to vector<8x384xf32>
    %141 = arith.addf %140, %139 : vector<8x384xf32>
    %142 = arith.divf %140, %141 : vector<8x384xf32>
    %143 = vector.extract_strided_slice %142 {offsets = [0, 0], sizes = [8, 128], strides = [1, 1]} : vector<8x384xf32> to vector<8x128xf32>
    %144 = vector.extract_strided_slice %142 {offsets = [0, 128], sizes = [8, 128], strides = [1, 1]} : vector<8x384xf32> to vector<8x128xf32>
    %145 = vector.extract_strided_slice %142 {offsets = [0, 256], sizes = [8, 128], strides = [1, 1]} : vector<8x384xf32> to vector<8x128xf32>
    %146 = vector.extract_strided_slice %136 {offsets = [0, 384], sizes = [8, 128], strides = [1, 1]} : vector<8x512xf32> to vector<8x128xf32>
    %147 = math.tanh %146 : vector<8x128xf32>
    %148 = arith.mulf %144, %129 : vector<8x128xf32>
    %149 = arith.mulf %143, %147 : vector<8x128xf32>
    %150 = arith.addf %148, %149 : vector<8x128xf32>
    %151 = math.tanh %150 : vector<8x128xf32>
    %152 = arith.mulf %145, %151 : vector<8x128xf32>
    %c7_i32 = arith.constant 7 : i32
    %153 = arith.index_cast %c7_i32 : i32 to index
    %c0_34 = arith.constant 0 : index
    %c0_35 = arith.constant 0 : index
    %154 = vector.load %arg1[%153, %c0_34, %c0_35] : memref<8x8x512xf32, #tpu.memory_space<vmem>>, vector<1x8x512xf32>
    %155 = vector.shape_cast %154 : vector<1x8x512xf32> to vector<8x512xf32>
    %cst_36 = arith.constant dense<0.000000e+00> : vector<8x512xf32>
    %156 = tpu.matmul %152, %3, %cst_36 {dimension_numbers = #tpu.dot_dimension_numbers<[1], [0], [0], [1], [0, 0, 1, 1], [], []>} : vector<8x128xf32>, vector<128x512xf32>, vector<8x512xf32> -> vector<8x512xf32>
    %157 = arith.addf %155, %156 : vector<8x512xf32>
    %158 = vector.extract_strided_slice %157 {offsets = [0, 0], sizes = [8, 384], strides = [1, 1]} : vector<8x512xf32> to vector<8x384xf32>
    %159 = arith.negf %158 : vector<8x384xf32>
    %160 = math.exp %159 : vector<8x384xf32>
    %cst_37 = arith.constant 1.000000e+00 : f32
    %161 = vector.broadcast %cst_37 : f32 to vector<8x384xf32>
    %162 = arith.addf %161, %160 : vector<8x384xf32>
    %163 = arith.divf %161, %162 : vector<8x384xf32>
    %164 = vector.extract_strided_slice %163 {offsets = [0, 0], sizes = [8, 128], strides = [1, 1]} : vector<8x384xf32> to vector<8x128xf32>
    %165 = vector.extract_strided_slice %163 {offsets = [0, 128], sizes = [8, 128], strides = [1, 1]} : vector<8x384xf32> to vector<8x128xf32>
    %166 = vector.extract_strided_slice %163 {offsets = [0, 256], sizes = [8, 128], strides = [1, 1]} : vector<8x384xf32> to vector<8x128xf32>
    %167 = vector.extract_strided_slice %157 {offsets = [0, 384], sizes = [8, 128], strides = [1, 1]} : vector<8x512xf32> to vector<8x128xf32>
    %168 = math.tanh %167 : vector<8x128xf32>
    %169 = arith.mulf %165, %150 : vector<8x128xf32>
    %170 = arith.mulf %164, %168 : vector<8x128xf32>
    %171 = arith.addf %169, %170 : vector<8x128xf32>
    %172 = math.tanh %171 : vector<8x128xf32>
    %173 = arith.mulf %166, %172 : vector<8x128xf32>
    %c8_i32 = arith.constant 8 : i32
    %c0_38 = arith.constant 0 : index
    %c0_39 = arith.constant 0 : index
    %174 = vector.load %arg6[%c0_38, %c0_39] : memref<8x128xf32, #tpu.memory_space<vmem>>, vector<8x128xf32>
    tpu.vector_store %arg6[%c0_38, %c0_39], %173 {strides = array<i32>} : memref<8x128xf32, #tpu.memory_space<vmem>>, vector<8x128xf32>,
    %c0_40 = arith.constant 0 : index
    %c0_41 = arith.constant 0 : index
    %175 = vector.load %arg7[%c0_40, %c0_41] : memref<8x128xf32, #tpu.memory_space<vmem>>, vector<8x128xf32>
    tpu.vector_store %arg7[%c0_40, %c0_41], %171 {strides = array<i32>} : memref<8x128xf32, #tpu.memory_space<vmem>>, vector<8x128xf32>,
    %c0_i32_42 = arith.constant 0 : i32
    %176 = arith.cmpi eq, %arg0, %c0_i32_42 : i32
    %177 = arith.extui %176 : i1 to i32
    %c0_i32_43 = arith.constant 0 : i32
    %178 = arith.cmpi ne, %177, %c0_i32_43 : i32
    scf.if %178 {
      %c0_44 = arith.constant 0 : index
      %c0_45 = arith.constant 0 : index
      %179 = vector.load %arg3[%c0_44, %c0_45] : memref<128x128xf32, #tpu.memory_space<vmem>>, vector<128x128xf32>
      %cst_46 = arith.constant dense<0.000000e+00> : vector<8x128xf32>
      %180 = tpu.matmul %173, %179, %cst_46 {dimension_numbers = #tpu.dot_dimension_numbers<[1], [0], [0], [1], [0, 0, 1, 1], [], []>} : vector<8x128xf32>, vector<128x128xf32>, vector<8x128xf32> -> vector<8x128xf32>
      %c0_47 = arith.constant 0 : index
      %c0_48 = arith.constant 0 : index
      %181 = vector.load %arg4[%c0_47, %c0_48] : memref<1x128xf32, #tpu.memory_space<vmem>>, vector<1x128xf32>
      %182 = vector.broadcast %181 : vector<1x128xf32> to vector<8x128xf32>
      %183 = arith.addf %180, %182 : vector<8x128xf32>
      %c0_49 = arith.constant 0 : index
      %c0_50 = arith.constant 0 : index
      %184 = vector.load %arg5[%c0_49, %c0_50] : memref<8x128xf32, #tpu.memory_space<vmem>>, vector<8x128xf32>
      tpu.vector_store %arg5[%c0_49, %c0_50], %183 {strides = array<i32>} : memref<8x128xf32, #tpu.memory_space<vmem>>, vector<8x128xf32>,
    } else {
    }
    return
  }
  func.func @transform_0(%arg0: i32) -> (i32, i32, i32) {
    %c0_i32 = arith.constant 0 : i32
    %c0_i32_0 = arith.constant 0 : i32
    %c0_i32_1 = arith.constant 0 : i32
    return %arg0, %c0_i32, %c0_i32_0 : i32, i32, i32
  }
  func.func @transform_1(%arg0: i32) -> (i32, i32) {
    %c0_i32 = arith.constant 0 : i32
    %c0_i32_0 = arith.constant 0 : i32
    %c0_i32_1 = arith.constant 0 : i32
    return %c0_i32, %c0_i32_0 : i32, i32
  }
  func.func @transform_2(%arg0: i32) -> (i32, i32) {
    %c0_i32 = arith.constant 0 : i32
    %c0_i32_0 = arith.constant 0 : i32
    %c0_i32_1 = arith.constant 0 : i32
    return %c0_i32, %c0_i32_0 : i32, i32
  }
  func.func @transform_3(%arg0: i32) -> (i32, i32) {
    %c0_i32 = arith.constant 0 : i32
    %c0_i32_0 = arith.constant 0 : i32
    %c0_i32_1 = arith.constant 0 : i32
    return %c0_i32, %c0_i32_0 : i32, i32
  }
  func.func @transform_4(%arg0: i32) -> (i32, i32) {
    %c0_i32 = arith.constant 0 : i32
    %c0_i32_0 = arith.constant 0 : i32
    %c0_i32_1 = arith.constant 0 : i32
    return %c0_i32, %c0_i32_0 : i32, i32
  }
}

</mosaic_0001>

<llo_original>
// kernel: tpu_custom_call.1
$region0: #{tpu_custom_call.1}
  #allocation0 [shape = 'u32[]', space=smem, size = 0x4, offset = 0x4, fixed_abs, tag = 'smem constant byte address 0x4 - core index']
  #allocation1 [shape = 'u32[144,128]{1,0:T(1,128)}', space=vmem, size = 0x12000, scoped, tag = 'internal scratch']
  #allocation2 [shape = 'f32[8,128]{1,0:T(8,128)}', space=vmem, size = 0x1000, scoped, tag = 'scratch operand']
  #allocation3 [shape = 'f32[8,128]{1,0:T(8,128)}', space=vmem, size = 0x1000, scoped, tag = 'scratch operand']
  %s0 = inlined_call_operand.hbm [shape: f32[8,8,512], index: 0, kind: input, shape index: {}]
  %s1 = inlined_call_operand.hbm [shape: f32[128,512], index: 1, kind: input, shape index: {}]
  %s2 = inlined_call_operand.hbm [shape: f32[128,128], index: 2, kind: input, shape index: {}]
  %s3 = inlined_call_operand.vmem [shape: f32[1,128], index: 3, kind: input, shape index: {}]
  %s4 = inlined_call_operand.hbm [shape: f32[8,128], index: 4, kind: output, shape index: {}]
  %s5 = sld [smem:[#allocation0]]
  $region46: #{tpu_custom_call.1} parent=0
    _
  %s7 = ssub.s32 1, %s5
  %s8 = scalar_select 0, %s7, %s5
  $region1: #{tpu_custom_call.1} parent=0
    #allocation4 [shape = 'u8[131072]{0}', space=vmem, size = 0x20000, scoped, tag = 'input window, operand 0, single buffered']
    #allocation5 [shape = 's32[1]{0}', space=sflag, size = 0x4, scoped, tag = 'scoped memory for tpu_custom_call.1']
    #allocation6 [shape = 's32[1]{0}', space=sflag, size = 0x4, scoped, tag = 'scoped memory for tpu_custom_call.1']
    #allocation7 [shape = 'u8[262144]{0}', space=vmem, size = 0x40000, scoped, tag = 'input window, operand 1, single buffered']
    #allocation8 [shape = 's32[1]{0}', space=sflag, size = 0x4, scoped, tag = 'scoped memory for tpu_custom_call.1']
    #allocation9 [shape = 'u8[65536]{0}', space=vmem, size = 0x10000, scoped, tag = 'input window, operand 2, single buffered']
    #allocation10 [shape = 'u8[4096]{0}', space=vmem, size = 0x1000, scoped, tag = 'output window, operand 0, single buffered']
    %9 = vsyncpa [#allocation5], 0
    %10 = vsyncpa [#allocation8], 0
    %11 = vsyncpa [#allocation6], 0
    // Predicated region
    $region2: #{tpu_custom_call.1} parent=1 // pred_check
      _
    $region3: #{tpu_custom_call.1} parent=1 // pred_check_branch
      %13 = sbr.rel (0) target = $region5
    $region4: #{tpu_custom_call.1} parent=1 // pred_region
      %s15 = ssub.s32 4096, 4096
      %16 = vsyncadd [#allocation5], %s15
      %s17 = sshll.u32 [#allocation4], 4
      %s18 = int_to_ptr.vmem [resolvable:$true] %s17
      %23 = dma.hbm_to_vmem [thread:$0]  %s0, 4096, %s18, [#allocation5], 512, 512, 32
    $region5: #{tpu_custom_call.1} parent=1 // pred_fallthru
      _
    // Predicated region
    $region6: #{tpu_custom_call.1} parent=1 // pred_check
      _
    $region7: #{tpu_custom_call.1} parent=1 // pred_check_branch
      %25 = sbr.rel (0) target = $region9
    $region8: #{tpu_custom_call.1} parent=1 // pred_region
      %s27 = ssub.s32 8192, 8192
      %28 = vsyncadd [#allocation8], %s27
      %s29 = sshll.u32 [#allocation7], 4
      %s30 = int_to_ptr.vmem [resolvable:$true] %s29
      %35 = dma.hbm_to_vmem [thread:$0]  %s1, 8192, %s30, [#allocation8], 512, 512, 32
    $region9: #{tpu_custom_call.1} parent=1 // pred_fallthru
      _
    // Predicated region
    $region10: #{tpu_custom_call.1} parent=1 // pred_check
      _
    $region11: #{tpu_custom_call.1} parent=1 // pred_check_branch
      %37 = sbr.rel (0) target = $region13
    $region12: #{tpu_custom_call.1} parent=1 // pred_region
      %s39 = ssub.s32 2048, 2048
      %40 = vsyncadd [#allocation8], %s39
      %s41 = sshll.u32 [#allocation9], 4
      %s42 = int_to_ptr.vmem [resolvable:$true] %s41
      %47 = dma.hbm_to_vmem [thread:$0]  %s2, 2048, %s42, [#allocation8], 128, 128, 8
    $region13: #{tpu_custom_call.1} parent=1 // pred_fallthru
      _
    // Predicated region
    $region14: #{tpu_custom_call.1} parent=1 // pred_check
      _
    $region15: #{tpu_custom_call.1} parent=1 // pred_check_branch
      %49 = sbr.rel (0) target = $region17
    $region16: #{tpu_custom_call.1} parent=1 // pred_region
      _
    $region17: #{tpu_custom_call.1} parent=1 // pred_fallthru
      _
    // Predicated region
    $region18: #{tpu_custom_call.1} parent=1 // pred_check
      _
    $region19: #{tpu_custom_call.1} parent=1 // pred_check_branch
      %51 = sbr.rel (0) target = $region21
    $region20: #{tpu_custom_call.1} parent=1 // pred_region
      %52 = dma.done [#allocation5], 4096
    $region21: #{tpu_custom_call.1} parent=1 // pred_fallthru
      _
    // Predicated region
    $region22: #{tpu_custom_call.1} parent=1 // pred_check
      _
    $region23: #{tpu_custom_call.1} parent=1 // pred_check_branch
      %54 = sbr.rel (0) target = $region25
    $region24: #{tpu_custom_call.1} parent=1 // pred_region
      %55 = dma.done [#allocation8], 8192
    $region25: #{tpu_custom_call.1} parent=1 // pred_fallthru
      _
    // Predicated region
    $region26: #{tpu_custom_call.1} parent=1 // pred_check
      _
    $region27: #{tpu_custom_call.1} parent=1 // pred_check_branch
      %57 = sbr.rel (0) target = $region29
    $region28: #{tpu_custom_call.1} parent=1 // pred_region
      %58 = dma.done [#allocation8], 2048
    $region29: #{tpu_custom_call.1} parent=1 // pred_fallthru
      _
    %p59 = scmp.eq.s32.totalorder 0, 0
    // Predicated region
    $region30: #{tpu_custom_call.1} parent=1 // pred_check
      %p60 = pneg %p59
    $region31: #{tpu_custom_call.1} parent=1 // pred_check_branch
      %62 = sbr.rel (%p60) target = $region33
    $region32: #{tpu_custom_call.1} parent=1 // pred_region
      %63 = vst [vmem:[#allocation2] sm:$0xff] 0.0
      %64 = vst [vmem:[#allocation3] sm:$0xff] 0.0
    $region33: #{tpu_custom_call.1} parent=1 // pred_fallthru
      _
    %v65 = vld [vmem:[#allocation7] sm:$0xff]
    %v66 = vld [vmem:[#allocation7 + $0x8] sm:$0xff]
    %v67 = vld [vmem:[#allocation7 + $0x10] sm:$0xff]
    %v68 = vld [vmem:[#allocation7 + $0x18] sm:$0xff]
    %v69 = vld [vmem:[#allocation7 + $0x20] sm:$0xff]
    %v70 = vld [vmem:[#allocation7 + $0x28] sm:$0xff]
    %v71 = vld [vmem:[#allocation7 + $0x30] sm:$0xff]
    %v72 = vld [vmem:[#allocation7 + $0x38] sm:$0xff]
    %v73 = vld [vmem:[#allocation7 + $0x40] sm:$0xff]
    %v74 = vld [vmem:[#allocation7 + $0x48] sm:$0xff]
    %v75 = vld [vmem:[#allocation7 + $0x50] sm:$0xff]
    %v76 = vld [vmem:[#allocation7 + $0x58] sm:$0xff]
    %v77 = vld [vmem:[#allocation7 + $0x60] sm:$0xff]
    %v78 = vld [vmem:[#allocation7 + $0x68] sm:$0xff]
    %v79 = vld [vmem:[#allocation7 + $0x70] sm:$0xff]
    %v80 = vld [vmem:[#allocation7 + $0x78] sm:$0xff]
    %v81 = vld [vmem:[#allocation7 + $0x80] sm:$0xff]
    %v82 = vld [vmem:[#allocation7 + $0x88] sm:$0xff]
    %v83 = vld [vmem:[#allocation7 + $0x90] sm:$0xff]
    %v84 = vld [vmem:[#allocation7 + $0x98] sm:$0xff]
    %v85 = vld [vmem:[#allocation7 + $0xa0] sm:$0xff]
    %v86 = vld [vmem:[#allocation7 + $0xa8] sm:$0xff]
    %v87 = vld [vmem:[#allocation7 + $0xb0] sm:$0xff]
    %v88 = vld [vmem:[#allocation7 + $0xb8] sm:$0xff]
    %v89 = vld [vmem:[#allocation7 + $0xc0] sm:$0xff]
    %v90 = vld [vmem:[#allocation7 + $0xc8] sm:$0xff]
    %v91 = vld [vmem:[#allocation7 + $0xd0] sm:$0xff]
    %v92 = vld [vmem:[#allocation7 + $0xd8] sm:$0xff]
    %v93 = vld [vmem:[#allocation7 + $0xe0] sm:$0xff]
    %v94 = vld [vmem:[#allocation7 + $0xe8] sm:$0xff]
    %v95 = vld [vmem:[#allocation7 + $0xf0] sm:$0xff]
    %v96 = vld [vmem:[#allocation7 + $0xf8] sm:$0xff]
    %v97 = vld [vmem:[#allocation7 + $0x100] sm:$0xff]
    %v98 = vld [vmem:[#allocation7 + $0x108] sm:$0xff]
    %v99 = vld [vmem:[#allocation7 + $0x110] sm:$0xff]
    %v100 = vld [vmem:[#allocation7 + $0x118] sm:$0xff]
    %v101 = vld [vmem:[#allocation7 + $0x120] sm:$0xff]
    %v102 = vld [vmem:[#allocation7 + $0x128] sm:$0xff]
    %v103 = vld [vmem:[#allocation7 + $0x130] sm:$0xff]
    %v104 = vld [vmem:[#allocation7 + $0x138] sm:$0xff]
    %v105 = vld [vmem:[#allocation7 + $0x140] sm:$0xff]
    %v106 = vld [vmem:[#allocation7 + $0x148] sm:$0xff]
    %v107 = vld [vmem:[#allocation7 + $0x150] sm:$0xff]
    %v108 = vld [vmem:[#allocation7 + $0x158] sm:$0xff]
    %v109 = vld [vmem:[#allocation7 + $0x160] sm:$0xff]
    %v110 = vld [vmem:[#allocation7 + $0x168] sm:$0xff]
    %v111 = vld [vmem:[#allocation7 + $0x170] sm:$0xff]
    %v112 = vld [vmem:[#allocation7 + $0x178] sm:$0xff]
    %v113 = vld [vmem:[#allocation7 + $0x180] sm:$0xff]
    %v114 = vld [vmem:[#allocation7 + $0x188] sm:$0xff]
    %v115 = vld [vmem:[#allocation7 + $0x190] sm:$0xff]
    %v116 = vld [vmem:[#allocation7 + $0x198] sm:$0xff]
    %v117 = vld [vmem:[#allocation7 + $0x1a0] sm:$0xff]
    %v118 = vld [vmem:[#allocation7 + $0x1a8] sm:$0xff]
    %v119 = vld [vmem:[#allocation7 + $0x1b0] sm:$0xff]
    %v120 = vld [vmem:[#allocation7 + $0x1b8] sm:$0xff]
    %v121 = vld [vmem:[#allocation7 + $0x1c0] sm:$0xff]
    %v122 = vld [vmem:[#allocation7 + $0x1c8] sm:$0xff]
    %v123 = vld [vmem:[#allocation7 + $0x1d0] sm:$0xff]
    %v124 = vld [vmem:[#allocation7 + $0x1d8] sm:$0xff]
    %v125 = vld [vmem:[#allocation7 + $0x1e0] sm:$0xff]
    %v126 = vld [vmem:[#allocation7 + $0x1e8] sm:$0xff]
    %v127 = vld [vmem:[#allocation7 + $0x1f0] sm:$0xff]
    %v128 = vld [vmem:[#allocation7 + $0x1f8] sm:$0xff]
    %v129 = vld [vmem:[#allocation2] sm:$0xff]
    %v130 = vld [vmem:[#allocation3] sm:$0xff]
    %v131 = vld [vmem:[#allocation4] sm:$0xff]
    %v132 = vld [vmem:[#allocation4 + $0x8] sm:$0xff]
    %v133 = vld [vmem:[#allocation4 + $0x10] sm:$0xff]
    %v134 = vld [vmem:[#allocation4 + $0x18] sm:$0xff]
    %135 = vmatprep.subr.mxu0 %v66
    %136 = vmatpush1.msra.mxu0 %v65
    %137 = vmatprep.subr.mxu0 %v70
    %138 = vmatpush1.msra.mxu0 %v69
    %139 = vmatprep.subr.mxu0 %v74
    %140 = vmatpush1.msra.mxu0 %v73
    %141 = vmatprep.subr.mxu0 %v78
    %142 = vmatpush1.msra.mxu0 %v77
    %143 = vmatprep.subr.mxu0 %v82
    %144 = vmatpush1.msra.mxu0 %v81
    %145 = vmatprep.subr.mxu0 %v86
    %146 = vmatpush1.msra.mxu0 %v85
    %147 = vmatprep.subr.mxu0 %v90
    %148 = vmatpush1.msra.mxu0 %v89
    %149 = vmatprep.subr.mxu0 %v94
    %150 = vmatpush1.msra.mxu0 %v93
    %151 = vmatprep.subr.mxu0 %v98
    %152 = vmatpush1.msra.mxu0 %v97
    %153 = vmatprep.subr.mxu0 %v102
    %154 = vmatpush1.msra.mxu0 %v101
    %155 = vmatprep.subr.mxu0 %v106
    %156 = vmatpush1.msra.mxu0 %v105
    %157 = vmatprep.subr.mxu0 %v110
    %158 = vmatpush1.msra.mxu0 %v109
    %159 = vmatprep.subr.mxu0 %v114
    %160 = vmatpush1.msra.mxu0 %v113
    %161 = vmatprep.subr.mxu0 %v118
    %162 = vmatpush1.msra.mxu0 %v117
    %163 = vmatprep.subr.mxu0 %v122
    %164 = vmatpush1.msra.mxu0 %v121
    %165 = vmatprep.subr.mxu0 %v126
    %166 = vmatpush1.msra.mxu0 %v125
    %167 = vmatprep.subr.mxu0 0.0
    %168 = vmatpush1.msra.mxu0 0.0
    %169 = vmatprep.subr.mxu0 0.0
    %170 = vmatpush1.msra.mxu0 0.0
    %171 = vmatprep.subr.mxu0 0.0
    %172 = vmatpush1.msra.mxu0 0.0
    %173 = vmatprep.subr.mxu0 0.0
    %174 = vmatpush1.msra.mxu0 0.0
    %175 = vmatprep.subr.mxu0 0.0
    %176 = vmatpush1.msra.mxu0 0.0
    %177 = vmatprep.subr.mxu0 0.0
    %178 = vmatpush1.msra.mxu0 0.0
    %179 = vmatprep.subr.mxu0 0.0
    %180 = vmatpush1.msra.mxu0 0.0
    %181 = vmatprep.subr.mxu0 0.0
    %182 = vmatpush1.msra.mxu0 0.0
    %183 = vmatprep.subr.mxu0 0.0
    %184 = vmatpush1.msra.mxu0 0.0
    %185 = vmatprep.subr.mxu0 0.0
    %186 = vmatpush1.msra.mxu0 0.0
    %187 = vmatprep.subr.mxu0 0.0
    %188 = vmatpush1.msra.mxu0 0.0
    %189 = vmatprep.subr.mxu0 0.0
    %190 = vmatpush1.msra.mxu0 0.0
    %191 = vmatprep.subr.mxu0 0.0
    %192 = vmatpush1.msra.mxu0 0.0
    %193 = vmatprep.subr.mxu0 0.0
    %194 = vmatpush1.msra.mxu0 0.0
    %195 = vmatprep.subr.mxu0 0.0
    %196 = vmatpush1.msra.mxu0 0.0
    %197 = vmatprep.subr.mxu0 0.0
    %198 = vmatpush1.msra.mxu0 0.0
    %199 = vmatprep.mubr.f32.mxu0 0.0
    %200 = vmatmul.mubr.f32.gmra.mrb[0].mxu0 %v129
    %v201 = vpop.f32.mrb[0].mxu0
    %v202 = vadd.f32 0.0, %v201
    %v203 = vpop.f32.mrb[0].mxu0
    %v204 = vadd.f32 0.0, %v203
    %205 = vdwg.mxu0
    %206 = vmatprep.subr.mxu0 %v68
    %207 = vmatpush1.msra.mxu0 %v67
    %208 = vmatprep.subr.mxu0 %v72
    %209 = vmatpush1.msra.mxu0 %v71
    %210 = vmatprep.subr.mxu0 %v76
    %211 = vmatpush1.msra.mxu0 %v75
    %212 = vmatprep.subr.mxu0 %v80
    %213 = vmatpush1.msra.mxu0 %v79
    %214 = vmatprep.subr.mxu0 %v84
    %215 = vmatpush1.msra.mxu0 %v83
    %216 = vmatprep.subr.mxu0 %v88
    %217 = vmatpush1.msra.mxu0 %v87
    %218 = vmatprep.subr.mxu0 %v92
    %219 = vmatpush1.msra.mxu0 %v91
    %220 = vmatprep.subr.mxu0 %v96
    %221 = vmatpush1.msra.mxu0 %v95
    %222 = vmatprep.subr.mxu0 %v100
    %223 = vmatpush1.msra.mxu0 %v99
    %224 = vmatprep.subr.mxu0 %v104
    %225 = vmatpush1.msra.mxu0 %v103
    %226 = vmatprep.subr.mxu0 %v108
    %227 = vmatpush1.msra.mxu0 %v107
    %228 = vmatprep.subr.mxu0 %v112
    %229 = vmatpush1.msra.mxu0 %v111
    %230 = vmatprep.subr.mxu0 %v116
    %231 = vmatpush1.msra.mxu0 %v115
    %232 = vmatprep.subr.mxu0 %v120
    %233 = vmatpush1.msra.mxu0 %v119
    %234 = vmatprep.subr.mxu0 %v124
    %235 = vmatpush1.msra.mxu0 %v123
    %236 = vmatprep.subr.mxu0 %v128
    %237 = vmatpush1.msra.mxu0 %v127
    %238 = vmatprep.subr.mxu0 0.0
    %239 = vmatpush1.msra.mxu0 0.0
    %240 = vmatprep.subr.mxu0 0.0
    %241 = vmatpush1.msra.mxu0 0.0
    %242 = vmatprep.subr.mxu0 0.0
    %243 = vmatpush1.msra.mxu0 0.0
    %244 = vmatprep.subr.mxu0 0.0
    %245 = vmatpush1.msra.mxu0 0.0
    %246 = vmatprep.subr.mxu0 0.0
    %247 = vmatpush1.msra.mxu0 0.0
    %248 = vmatprep.subr.mxu0 0.0
    %249 = vmatpush1.msra.mxu0 0.0
    %250 = vmatprep.subr.mxu0 0.0
    %251 = vmatpush1.msra.mxu0 0.0
    %252 = vmatprep.subr.mxu0 0.0
    %253 = vmatpush1.msra.mxu0 0.0
    %254 = vmatprep.subr.mxu0 0.0
    %255 = vmatpush1.msra.mxu0 0.0
    %256 = vmatprep.subr.mxu0 0.0
    %257 = vmatpush1.msra.mxu0 0.0
    %258 = vmatprep.subr.mxu0 0.0
    %259 = vmatpush1.msra.mxu0 0.0
    %260 = vmatprep.subr.mxu0 0.0
    %261 = vmatpush1.msra.mxu0 0.0
    %262 = vmatprep.subr.mxu0 0.0
    %263 = vmatpush1.msra.mxu0 0.0
    %264 = vmatprep.subr.mxu0 0.0
    %265 = vmatpush1.msra.mxu0 0.0
    %266 = vmatprep.subr.mxu0 0.0
    %267 = vmatpush1.msra.mxu0 0.0
    %268 = vmatprep.subr.mxu0 0.0
    %269 = vmatpush1.msra.mxu0 0.0
    %270 = vmatprep.mubr.f32.mxu0 0.0
    %271 = vmatmul.mubr.f32.gmra.mrb[0].mxu0 %v129
    %v272 = vpop.f32.mrb[0].mxu0
    %v273 = vadd.f32 0.0, %v272
    %v274 = vpop.f32.mrb[0].mxu0
    %v275 = vadd.f32 0.0, %v274
    %276 = vdwg.mxu0
    %v277 = vadd.f32 %v131, %v202
    %v278 = vadd.f32 %v132, %v204
    %v279 = vadd.f32 %v133, %v273
    %v280 = vadd.f32 %v134, %v275
    %v281 = vxor.u32 %v277, 2147483648
    %v282 = vxor.u32 %v278, 2147483648
    %v283 = vxor.u32 %v279, 2147483648
    %v284 = vmul.f32 %v281, 1.442695
    %v285 = vpow.pop %v284
    %v286 = vmul.f32 %v282, 1.442695
    %v287 = vpow.pop %v286
    %v288 = vmul.f32 %v283, 1.442695
    %v289 = vpow.pop %v288
    %v290 = vadd.f32 %v285, 1.0
    %v291 = vadd.f32 %v287, 1.0
    %v292 = vadd.f32 %v289, 1.0
    %v293 = vrcp.pop %v290
    %v294 = vmul.f32 1.0, %v293
    %v295 = vrcp.pop %v291
    %v296 = vmul.f32 1.0, %v295
    %v297 = vrcp.pop %v292
    %v298 = vmul.f32 1.0, %v297
    %v299 = vtanh.pop %v280
    %v300 = vmul.f32 %v296, %v130
    %v301 = vmul.f32 %v294, %v299
    %v302 = vadd.f32 %v300, %v301
    %v303 = vtanh.pop %v302
    %v304 = vmul.f32 %v298, %v303
    %s305 = scalar_lea.vmem [#allocation4], 32
    %v306 = vld [vmem:[%s305] sm:$0xff]
    %v307 = vld [vmem:[%s305 + $0x8] sm:$0xff]
    %v308 = vld [vmem:[%s305 + $0x10] sm:$0xff]
    %v309 = vld [vmem:[%s305 + $0x18] sm:$0xff]
    %310 = vmatprep.subr.mxu0 %v66
    %311 = vmatpush1.msra.mxu0 %v65
    %312 = vmatprep.subr.mxu0 %v70
    %313 = vmatpush1.msra.mxu0 %v69
    %314 = vmatprep.subr.mxu0 %v74
    %315 = vmatpush1.msra.mxu0 %v73
    %316 = vmatprep.subr.mxu0 %v78
    %317 = vmatpush1.msra.mxu0 %v77
    %318 = vmatprep.subr.mxu0 %v82
    %319 = vmatpush1.msra.mxu0 %v81
    %320 = vmatprep.subr.mxu0 %v86
    %321 = vmatpush1.msra.mxu0 %v85
    %322 = vmatprep.subr.mxu0 %v90
    %323 = vmatpush1.msra.mxu0 %v89
    %324 = vmatprep.subr.mxu0 %v94
    %325 = vmatpush1.msra.mxu0 %v93
    %326 = vmatprep.subr.mxu0 %v98
    %327 = vmatpush1.msra.mxu0 %v97
    %328 = vmatprep.subr.mxu0 %v102
    %329 = vmatpush1.msra.mxu0 %v101
    %330 = vmatprep.subr.mxu0 %v106
    %331 = vmatpush1.msra.mxu0 %v105
    %332 = vmatprep.subr.mxu0 %v110
    %333 = vmatpush1.msra.mxu0 %v109
    %334 = vmatprep.subr.mxu0 %v114
    %335 = vmatpush1.msra.mxu0 %v113
    %336 = vmatprep.subr.mxu0 %v118
    %337 = vmatpush1.msra.mxu0 %v117
    %338 = vmatprep.subr.mxu0 %v122
    %339 = vmatpush1.msra.mxu0 %v121
    %340 = vmatprep.subr.mxu0 %v126
    %341 = vmatpush1.msra.mxu0 %v125
    %342 = vmatprep.subr.mxu0 0.0
    %343 = vmatpush1.msra.mxu0 0.0
    %344 = vmatprep.subr.mxu0 0.0
    %345 = vmatpush1.msra.mxu0 0.0
    %346 = vmatprep.subr.mxu0 0.0
    %347 = vmatpush1.msra.mxu0 0.0
    %348 = vmatprep.subr.mxu0 0.0
    %349 = vmatpush1.msra.mxu0 0.0
    %350 = vmatprep.subr.mxu0 0.0
    %351 = vmatpush1.msra.mxu0 0.0
    %352 = vmatprep.subr.mxu0 0.0
    %353 = vmatpush1.msra.mxu0 0.0
    %354 = vmatprep.subr.mxu0 0.0
    %355 = vmatpush1.msra.mxu0 0.0
    %356 = vmatprep.subr.mxu0 0.0
    %357 = vmatpush1.msra.mxu0 0.0
    %358 = vmatprep.subr.mxu0 0.0
    %359 = vmatpush1.msra.mxu0 0.0
    %360 = vmatprep.subr.mxu0 0.0
    %361 = vmatpush1.msra.mxu0 0.0
    %362 = vmatprep.subr.mxu0 0.0
    %363 = vmatpush1.msra.mxu0 0.0
    %364 = vmatprep.subr.mxu0 0.0
    %365 = vmatpush1.msra.mxu0 0.0
    %366 = vmatprep.subr.mxu0 0.0
    %367 = vmatpush1.msra.mxu0 0.0
    %368 = vmatprep.subr.mxu0 0.0
    %369 = vmatpush1.msra.mxu0 0.0
    %370 = vmatprep.subr.mxu0 0.0
    %371 = vmatpush1.msra.mxu0 0.0
    %372 = vmatprep.subr.mxu0 0.0
    %373 = vmatpush1.msra.mxu0 0.0
    %374 = vmatprep.mubr.f32.mxu0 0.0
    %375 = vmatmul.mubr.f32.gmra.mrb[0].mxu0 %v304
    %v376 = vpop.f32.mrb[0].mxu0
    %v377 = vadd.f32 0.0, %v376
    %v378 = vpop.f32.mrb[0].mxu0
    %v379 = vadd.f32 0.0, %v378
    %380 = vdwg.mxu0
    %381 = vmatprep.subr.mxu0 %v68
    %382 = vmatpush1.msra.mxu0 %v67
    %383 = vmatprep.subr.mxu0 %v72
    %384 = vmatpush1.msra.mxu0 %v71
    %385 = vmatprep.subr.mxu0 %v76
    %386 = vmatpush1.msra.mxu0 %v75
    %387 = vmatprep.subr.mxu0 %v80
    %388 = vmatpush1.msra.mxu0 %v79
    %389 = vmatprep.subr.mxu0 %v84
    %390 = vmatpush1.msra.mxu0 %v83
    %391 = vmatprep.subr.mxu0 %v88
    %392 = vmatpush1.msra.mxu0 %v87
    %393 = vmatprep.subr.mxu0 %v92
    %394 = vmatpush1.msra.mxu0 %v91
    %395 = vmatprep.subr.mxu0 %v96
    %396 = vmatpush1.msra.mxu0 %v95
    %397 = vmatprep.subr.mxu0 %v100
    %398 = vmatpush1.msra.mxu0 %v99
    %399 = vmatprep.subr.mxu0 %v104
    %400 = vmatpush1.msra.mxu0 %v103
    %401 = vmatprep.subr.mxu0 %v108
    %402 = vmatpush1.msra.mxu0 %v107
    %403 = vmatprep.subr.mxu0 %v112
    %404 = vmatpush1.msra.mxu0 %v111
    %405 = vmatprep.subr.mxu0 %v116
    %406 = vmatpush1.msra.mxu0 %v115
    %407 = vmatprep.subr.mxu0 %v120
    %408 = vmatpush1.msra.mxu0 %v119
    %409 = vmatprep.subr.mxu0 %v124
    %410 = vmatpush1.msra.mxu0 %v123
    %411 = vmatprep.subr.mxu0 %v128
    %412 = vmatpush1.msra.mxu0 %v127
    %413 = vmatprep.subr.mxu0 0.0
    %414 = vmatpush1.msra.mxu0 0.0
    %415 = vmatprep.subr.mxu0 0.0
    %416 = vmatpush1.msra.mxu0 0.0
    %417 = vmatprep.subr.mxu0 0.0
    %418 = vmatpush1.msra.mxu0 0.0
    %419 = vmatprep.subr.mxu0 0.0
    %420 = vmatpush1.msra.mxu0 0.0
    %421 = vmatprep.subr.mxu0 0.0
    %422 = vmatpush1.msra.mxu0 0.0
    %423 = vmatprep.subr.mxu0 0.0
    %424 = vmatpush1.msra.mxu0 0.0
    %425 = vmatprep.subr.mxu0 0.0
    %426 = vmatpush1.msra.mxu0 0.0
    %427 = vmatprep.subr.mxu0 0.0
    %428 = vmatpush1.msra.mxu0 0.0
    %429 = vmatprep.subr.mxu0 0.0
    %430 = vmatpush1.msra.mxu0 0.0
    %431 = vmatprep.subr.mxu0 0.0
    %432 = vmatpush1.msra.mxu0 0.0
    %433 = vmatprep.subr.mxu0 0.0
    %434 = vmatpush1.msra.mxu0 0.0
    %435 = vmatprep.subr.mxu0 0.0
    %436 = vmatpush1.msra.mxu0 0.0
    %437 = vmatprep.subr.mxu0 0.0
    %438 = vmatpush1.msra.mxu0 0.0
    %439 = vmatprep.subr.mxu0 0.0
    %440 = vmatpush1.msra.mxu0 0.0
    %441 = vmatprep.subr.mxu0 0.0
    %442 = vmatpush1.msra.mxu0 0.0
    %443 = vmatprep.subr.mxu0 0.0
    %444 = vmatpush1.msra.mxu0 0.0
    %445 = vmatprep.mubr.f32.mxu0 0.0
    %446 = vmatmul.mubr.f32.gmra.mrb[0].mxu0 %v304
    %v447 = vpop.f32.mrb[0].mxu0
    %v448 = vadd.f32 0.0, %v447
    %v449 = vpop.f32.mrb[0].mxu0
    %v450 = vadd.f32 0.0, %v449
    %451 = vdwg.mxu0
    %v452 = vadd.f32 %v306, %v377
    %v453 = vadd.f32 %v307, %v379
    %v454 = vadd.f32 %v308, %v448
    %v455 = vadd.f32 %v309, %v450
    %v456 = vxor.u32 %v452, 2147483648
    %v457 = vxor.u32 %v453, 2147483648
    %v458 = vxor.u32 %v454, 2147483648
    %v459 = vmul.f32 %v456, 1.442695
    %v460 = vpow.pop %v459
    %v461 = vmul.f32 %v457, 1.442695
    %v462 = vpow.pop %v461
    %v463 = vmul.f32 %v458, 1.442695
    %v464 = vpow.pop %v463
    %v465 = vadd.f32 %v460, 1.0
    %v466 = vadd.f32 %v462, 1.0
    %v467 = vadd.f32 %v464, 1.0
    %v468 = vrcp.pop %v465
    %v469 = vmul.f32 1.0, %v468
    %v470 = vrcp.pop %v466
    %v471 = vmul.f32 1.0, %v470
    %v472 = vrcp.pop %v467
    %v473 = vmul.f32 1.0, %v472
    %v474 = vtanh.pop %v455
    %v475 = vmul.f32 %v471, %v302
    %v476 = vmul.f32 %v469, %v474
    %v477 = vadd.f32 %v475, %v476
    %v478 = vtanh.pop %v477
    %v479 = vmul.f32 %v473, %v478
    %s480 = scalar_lea.vmem [#allocation4], 64
    %v481 = vld [vmem:[%s480] sm:$0xff]
    %v482 = vld [vmem:[%s480 + $0x8] sm:$0xff]
    %v483 = vld [vmem:[%s480 + $0x10] sm:$0xff]
    %v484 = vld [vmem:[%s480 + $0x18] sm:$0xff]
    %485 = vmatprep.subr.mxu0 %v66
    %486 = vmatpush1.msra.mxu0 %v65
    %487 = vmatprep.subr.mxu0 %v70
    %488 = vmatpush1.msra.mxu0 %v69
    %489 = vmatprep.subr.mxu0 %v74
    %490 = vmatpush1.msra.mxu0 %v73
    %491 = vmatprep.subr.mxu0 %v78
    %492 = vmatpush1.msra.mxu0 %v77
    %493 = vmatprep.subr.mxu0 %v82
    %494 = vmatpush1.msra.mxu0 %v81
    %495 = vmatprep.subr.mxu0 %v86
    %496 = vmatpush1.msra.mxu0 %v85
    %497 = vmatprep.subr.mxu0 %v90
    %498 = vmatpush1.msra.mxu0 %v89
    %499 = vmatprep.subr.mxu0 %v94
    %500 = vmatpush1.msra.mxu0 %v93
    %501 = vmatprep.subr.mxu0 %v98
    %502 = vmatpush1.msra.mxu0 %v97
    %503 = vmatprep.subr.mxu0 %v102
    %504 = vmatpush1.msra.mxu0 %v101
    %505 = vmatprep.subr.mxu0 %v106
    %506 = vmatpush1.msra.mxu0 %v105
    %507 = vmatprep.subr.mxu0 %v110
    %508 = vmatpush1.msra.mxu0 %v109
    %509 = vmatprep.subr.mxu0 %v114
    %510 = vmatpush1.msra.mxu0 %v113
    %511 = vmatprep.subr.mxu0 %v118
    %512 = vmatpush1.msra.mxu0 %v117
    %513 = vmatprep.subr.mxu0 %v122
    %514 = vmatpush1.msra.mxu0 %v121
    %515 = vmatprep.subr.mxu0 %v126
    %516 = vmatpush1.msra.mxu0 %v125
    %517 = vmatprep.subr.mxu0 0.0
    %518 = vmatpush1.msra.mxu0 0.0
    %519 = vmatprep.subr.mxu0 0.0
    %520 = vmatpush1.msra.mxu0 0.0
    %521 = vmatprep.subr.mxu0 0.0
    %522 = vmatpush1.msra.mxu0 0.0
    %523 = vmatprep.subr.mxu0 0.0
    %524 = vmatpush1.msra.mxu0 0.0
    %525 = vmatprep.subr.mxu0 0.0
    %526 = vmatpush1.msra.mxu0 0.0
    %527 = vmatprep.subr.mxu0 0.0
    %528 = vmatpush1.msra.mxu0 0.0
    %529 = vmatprep.subr.mxu0 0.0
    %530 = vmatpush1.msra.mxu0 0.0
    %531 = vmatprep.subr.mxu0 0.0
    %532 = vmatpush1.msra.mxu0 0.0
    %533 = vmatprep.subr.mxu0 0.0
    %534 = vmatpush1.msra.mxu0 0.0
    %535 = vmatprep.subr.mxu0 0.0
    %536 = vmatpush1.msra.mxu0 0.0
    %537 = vmatprep.subr.mxu0 0.0
    %538 = vmatpush1.msra.mxu0 0.0
    %539 = vmatprep.subr.mxu0 0.0
    %540 = vmatpush1.msra.mxu0 0.0
    %541 = vmatprep.subr.mxu0 0.0
    %542 = vmatpush1.msra.mxu0 0.0
    %543 = vmatprep.subr.mxu0 0.0
    %544 = vmatpush1.msra.mxu0 0.0
    %545 = vmatprep.subr.mxu0 0.0
    %546 = vmatpush1.msra.mxu0 0.0
    %547 = vmatprep.subr.mxu0 0.0
    %548 = vmatpush1.msra.mxu0 0.0
    %549 = vmatprep.mubr.f32.mxu0 0.0
    %550 = vmatmul.mubr.f32.gmra.mrb[0].mxu0 %v479
    %v551 = vpop.f32.mrb[0].mxu0
    %v552 = vadd.f32 0.0, %v551
    %v553 = vpop.f32.mrb[0].mxu0
    %v554 = vadd.f32 0.0, %v553
    %555 = vdwg.mxu0
    %556 = vmatprep.subr.mxu0 %v68
    %557 = vmatpush1.msra.mxu0 %v67
    %558 = vmatprep.subr.mxu0 %v72
    %559 = vmatpush1.msra.mxu0 %v71
    %560 = vmatprep.subr.mxu0 %v76
    %561 = vmatpush1.msra.mxu0 %v75
    %562 = vmatprep.subr.mxu0 %v80
    %563 = vmatpush1.msra.mxu0 %v79
    %564 = vmatprep.subr.mxu0 %v84
    %565 = vmatpush1.msra.mxu0 %v83
    %566 = vmatprep.subr.mxu0 %v88
    %567 = vmatpush1.msra.mxu0 %v87
    %568 = vmatprep.subr.mxu0 %v92
    %569 = vmatpush1.msra.mxu0 %v91
    %570 = vmatprep.subr.mxu0 %v96
    %571 = vmatpush1.msra.mxu0 %v95
    %572 = vmatprep.subr.mxu0 %v100
    %573 = vmatpush1.msra.mxu0 %v99
    %574 = vmatprep.subr.mxu0 %v104
    %575 = vmatpush1.msra.mxu0 %v103
    %576 = vmatprep.subr.mxu0 %v108
    %577 = vmatpush1.msra.mxu0 %v107
    %578 = vmatprep.subr.mxu0 %v112
    %579 = vmatpush1.msra.mxu0 %v111
    %580 = vmatprep.subr.mxu0 %v116
    %581 = vmatpush1.msra.mxu0 %v115
    %582 = vmatprep.subr.mxu0 %v120
    %583 = vmatpush1.msra.mxu0 %v119
    %584 = vmatprep.subr.mxu0 %v124
    %585 = vmatpush1.msra.mxu0 %v123
    %586 = vmatprep.subr.mxu0 %v128
    %587 = vmatpush1.msra.mxu0 %v127
    %588 = vmatprep.subr.mxu0 0.0
    %589 = vmatpush1.msra.mxu0 0.0
    %590 = vmatprep.subr.mxu0 0.0
    %591 = vmatpush1.msra.mxu0 0.0
    %592 = vmatprep.subr.mxu0 0.0
    %593 = vmatpush1.msra.mxu0 0.0
    %594 = vmatprep.subr.mxu0 0.0
    %595 = vmatpush1.msra.mxu0 0.0
    %596 = vmatprep.subr.mxu0 0.0
    %597 = vmatpush1.msra.mxu0 0.0
    %598 = vmatprep.subr.mxu0 0.0
    %599 = vmatpush1.msra.mxu0 0.0
    %600 = vmatprep.subr.mxu0 0.0
    %601 = vmatpush1.msra.mxu0 0.0
    %602 = vmatprep.subr.mxu0 0.0
    %603 = vmatpush1.msra.mxu0 0.0
    %604 = vmatprep.subr.mxu0 0.0
    %605 = vmatpush1.msra.mxu0 0.0
    %606 = vmatprep.subr.mxu0 0.0
    %607 = vmatpush1.msra.mxu0 0.0
    %608 = vmatprep.subr.mxu0 0.0
    %609 = vmatpush1.msra.mxu0 0.0
    %610 = vmatprep.subr.mxu0 0.0
    %611 = vmatpush1.msra.mxu0 0.0
    %612 = vmatprep.subr.mxu0 0.0
    %613 = vmatpush1.msra.mxu0 0.0
    %614 = vmatprep.subr.mxu0 0.0
    %615 = vmatpush1.msra.mxu0 0.0
    %616 = vmatprep.subr.mxu0 0.0
    %617 = vmatpush1.msra.mxu0 0.0
    %618 = vmatprep.subr.mxu0 0.0
    %619 = vmatpush1.msra.mxu0 0.0
    %620 = vmatprep.mubr.f32.mxu0 0.0
    %621 = vmatmul.mubr.f32.gmra.mrb[0].mxu0 %v479
    %v622 = vpop.f32.mrb[0].mxu0
    %v623 = vadd.f32 0.0, %v622
    %v624 = vpop.f32.mrb[0].mxu0
    %v625 = vadd.f32 0.0, %v624
    %626 = vdwg.mxu0
    %v627 = vadd.f32 %v481, %v552
    %v628 = vadd.f32 %v482, %v554
    %v629 = vadd.f32 %v483, %v623
    %v630 = vadd.f32 %v484, %v625
    %v631 = vxor.u32 %v627, 2147483648
    %v632 = vxor.u32 %v628, 2147483648
    %v633 = vxor.u32 %v629, 2147483648
    %v634 = vmul.f32 %v631, 1.442695
    %v635 = vpow.pop %v634
    %v636 = vmul.f32 %v632, 1.442695
    %v637 = vpow.pop %v636
    %v638 = vmul.f32 %v633, 1.442695
    %v639 = vpow.pop %v638
    %v640 = vadd.f32 %v635, 1.0
    %v641 = vadd.f32 %v637, 1.0
    %v642 = vadd.f32 %v639, 1.0
    %v643 = vrcp.pop %v640
    %v644 = vmul.f32 1.0, %v643
    %v645 = vrcp.pop %v641
    %v646 = vmul.f32 1.0, %v645
    %v647 = vrcp.pop %v642
    %v648 = vmul.f32 1.0, %v647
    %v649 = vtanh.pop %v630
    %v650 = vmul.f32 %v646, %v477
    %v651 = vmul.f32 %v644, %v649
    %v652 = vadd.f32 %v650, %v651
    %v653 = vtanh.pop %v652
    %v654 = vmul.f32 %v648, %v653
    %s655 = scalar_lea.vmem [#allocation4], 96
    %v656 = vld [vmem:[%s655] sm:$0xff]
    %v657 = vld [vmem:[%s655 + $0x8] sm:$0xff]
    %v658 = vld [vmem:[%s655 + $0x10] sm:$0xff]
    %v659 = vld [vmem:[%s655 + $0x18] sm:$0xff]
    %660 = vmatprep.subr.mxu0 %v66
    %661 = vmatpush1.msra.mxu0 %v65
    %662 = vmatprep.subr.mxu0 %v70
    %663 = vmatpush1.msra.mxu0 %v69
    %664 = vmatprep.subr.mxu0 %v74
    %665 = vmatpush1.msra.mxu0 %v73
    %666 = vmatprep.subr.mxu0 %v78
    %667 = vmatpush1.msra.mxu0 %v77
    %668 = vmatprep.subr.mxu0 %v82
    %669 = vmatpush1.msra.mxu0 %v81
    %670 = vmatprep.subr.mxu0 %v86
    %671 = vmatpush1.msra.mxu0 %v85
    %672 = vmatprep.subr.mxu0 %v90
    %673 = vmatpush1.msra.mxu0 %v89
    %674 = vmatprep.subr.mxu0 %v94
    %675 = vmatpush1.msra.mxu0 %v93
    %676 = vmatprep.subr.mxu0 %v98
    %677 = vmatpush1.msra.mxu0 %v97
    %678 = vmatprep.subr.mxu0 %v102
    %679 = vmatpush1.msra.mxu0 %v101
    %680 = vmatprep.subr.mxu0 %v106
    %681 = vmatpush1.msra.mxu0 %v105
    %682 = vmatprep.subr.mxu0 %v110
    %683 = vmatpush1.msra.mxu0 %v109
    %684 = vmatprep.subr.mxu0 %v114
    %685 = vmatpush1.msra.mxu0 %v113
    %686 = vmatprep.subr.mxu0 %v118
    %687 = vmatpush1.msra.mxu0 %v117
    %688 = vmatprep.subr.mxu0 %v122
    %689 = vmatpush1.msra.mxu0 %v121
    %690 = vmatprep.subr.mxu0 %v126
    %691 = vmatpush1.msra.mxu0 %v125
    %692 = vmatprep.subr.mxu0 0.0
    %693 = vmatpush1.msra.mxu0 0.0
    %694 = vmatprep.subr.mxu0 0.0
    %695 = vmatpush1.msra.mxu0 0.0
    %696 = vmatprep.subr.mxu0 0.0
    %697 = vmatpush1.msra.mxu0 0.0
    %698 = vmatprep.subr.mxu0 0.0
    %699 = vmatpush1.msra.mxu0 0.0
    %700 = vmatprep.subr.mxu0 0.0
    %701 = vmatpush1.msra.mxu0 0.0
    %702 = vmatprep.subr.mxu0 0.0
    %703 = vmatpush1.msra.mxu0 0.0
    %704 = vmatprep.subr.mxu0 0.0
    %705 = vmatpush1.msra.mxu0 0.0
    %706 = vmatprep.subr.mxu0 0.0
    %707 = vmatpush1.msra.mxu0 0.0
    %708 = vmatprep.subr.mxu0 0.0
    %709 = vmatpush1.msra.mxu0 0.0
    %710 = vmatprep.subr.mxu0 0.0
    %711 = vmatpush1.msra.mxu0 0.0
    %712 = vmatprep.subr.mxu0 0.0
    %713 = vmatpush1.msra.mxu0 0.0
    %714 = vmatprep.subr.mxu0 0.0
    %715 = vmatpush1.msra.mxu0 0.0
    %716 = vmatprep.subr.mxu0 0.0
    %717 = vmatpush1.msra.mxu0 0.0
    %718 = vmatprep.subr.mxu0 0.0
    %719 = vmatpush1.msra.mxu0 0.0
    %720 = vmatprep.subr.mxu0 0.0
    %721 = vmatpush1.msra.mxu0 0.0
    %722 = vmatprep.subr.mxu0 0.0
    %723 = vmatpush1.msra.mxu0 0.0
    %724 = vmatprep.mubr.f32.mxu0 0.0
    %725 = vmatmul.mubr.f32.gmra.mrb[0].mxu0 %v654
    %v726 = vpop.f32.mrb[0].mxu0
    %v727 = vadd.f32 0.0, %v726
    %v728 = vpop.f32.mrb[0].mxu0
    %v729 = vadd.f32 0.0, %v728
    %730 = vdwg.mxu0
    %731 = vmatprep.subr.mxu0 %v68
    %732 = vmatpush1.msra.mxu0 %v67
    %733 = vmatprep.subr.mxu0 %v72
    %734 = vmatpush1.msra.mxu0 %v71
    %735 = vmatprep.subr.mxu0 %v76
    %736 = vmatpush1.msra.mxu0 %v75
    %737 = vmatprep.subr.mxu0 %v80
    %738 = vmatpush1.msra.mxu0 %v79
    %739 = vmatprep.subr.mxu0 %v84
    %740 = vmatpush1.msra.mxu0 %v83
    %741 = vmatprep.subr.mxu0 %v88
    %742 = vmatpush1.msra.mxu0 %v87
    %743 = vmatprep.subr.mxu0 %v92
    %744 = vmatpush1.msra.mxu0 %v91
    %745 = vmatprep.subr.mxu0 %v96
    %746 = vmatpush1.msra.mxu0 %v95
    %747 = vmatprep.subr.mxu0 %v100
    %748 = vmatpush1.msra.mxu0 %v99
    %749 = vmatprep.subr.mxu0 %v104
    %750 = vmatpush1.msra.mxu0 %v103
    %751 = vmatprep.subr.mxu0 %v108
    %752 = vmatpush1.msra.mxu0 %v107
    %753 = vmatprep.subr.mxu0 %v112
    %754 = vmatpush1.msra.mxu0 %v111
    %755 = vmatprep.subr.mxu0 %v116
    %756 = vmatpush1.msra.mxu0 %v115
    %757 = vmatprep.subr.mxu0 %v120
    %758 = vmatpush1.msra.mxu0 %v119
    %759 = vmatprep.subr.mxu0 %v124
    %760 = vmatpush1.msra.mxu0 %v123
    %761 = vmatprep.subr.mxu0 %v128
    %762 = vmatpush1.msra.mxu0 %v127
    %763 = vmatprep.subr.mxu0 0.0
    %764 = vmatpush1.msra.mxu0 0.0
    %765 = vmatprep.subr.mxu0 0.0
    %766 = vmatpush1.msra.mxu0 0.0
    %767 = vmatprep.subr.mxu0 0.0
    %768 = vmatpush1.msra.mxu0 0.0
    %769 = vmatprep.subr.mxu0 0.0
    %770 = vmatpush1.msra.mxu0 0.0
    %771 = vmatprep.subr.mxu0 0.0
    %772 = vmatpush1.msra.mxu0 0.0
    %773 = vmatprep.subr.mxu0 0.0
    %774 = vmatpush1.msra.mxu0 0.0
    %775 = vmatprep.subr.mxu0 0.0
    %776 = vmatpush1.msra.mxu0 0.0
    %777 = vmatprep.subr.mxu0 0.0
    %778 = vmatpush1.msra.mxu0 0.0
    %779 = vmatprep.subr.mxu0 0.0
    %780 = vmatpush1.msra.mxu0 0.0
    %781 = vmatprep.subr.mxu0 0.0
    %782 = vmatpush1.msra.mxu0 0.0
    %783 = vmatprep.subr.mxu0 0.0
    %784 = vmatpush1.msra.mxu0 0.0
    %785 = vmatprep.subr.mxu0 0.0
    %786 = vmatpush1.msra.mxu0 0.0
    %787 = vmatprep.subr.mxu0 0.0
    %788 = vmatpush1.msra.mxu0 0.0
    %789 = vmatprep.subr.mxu0 0.0
    %790 = vmatpush1.msra.mxu0 0.0
    %791 = vmatprep.subr.mxu0 0.0
    %792 = vmatpush1.msra.mxu0 0.0
    %793 = vmatprep.subr.mxu0 0.0
    %794 = vmatpush1.msra.mxu0 0.0
    %795 = vmatprep.mubr.f32.mxu0 0.0
    %796 = vmatmul.mubr.f32.gmra.mrb[0].mxu0 %v654
    %v797 = vpop.f32.mrb[0].mxu0
    %v798 = vadd.f32 0.0, %v797
    %v799 = vpop.f32.mrb[0].mxu0
    %v800 = vadd.f32 0.0, %v799
    %801 = vdwg.mxu0
    %v802 = vadd.f32 %v656, %v727
    %v803 = vadd.f32 %v657, %v729
    %v804 = vadd.f32 %v658, %v798
    %v805 = vadd.f32 %v659, %v800
    %v806 = vxor.u32 %v802, 2147483648
    %v807 = vxor.u32 %v803, 2147483648
    %v808 = vxor.u32 %v804, 2147483648
    %v809 = vmul.f32 %v806, 1.442695
    %v810 = vpow.pop %v809
    %v811 = vmul.f32 %v807, 1.442695
    %v812 = vpow.pop %v811
    %v813 = vmul.f32 %v808, 1.442695
    %v814 = vpow.pop %v813
    %v815 = vadd.f32 %v810, 1.0
    %v816 = vadd.f32 %v812, 1.0
    %v817 = vadd.f32 %v814, 1.0
    %v818 = vrcp.pop %v815
    %v819 = vmul.f32 1.0, %v818
    %v820 = vrcp.pop %v816
    %v821 = vmul.f32 1.0, %v820
    %v822 = vrcp.pop %v817
    %v823 = vmul.f32 1.0, %v822
    %v824 = vtanh.pop %v805
    %v825 = vmul.f32 %v821, %v652
    %v826 = vmul.f32 %v819, %v824
    %v827 = vadd.f32 %v825, %v826
    %v828 = vtanh.pop %v827
    %v829 = vmul.f32 %v823, %v828
    %s830 = scalar_lea.vmem [#allocation4], 128
    %v831 = vld [vmem:[%s830] sm:$0xff]
    %v832 = vld [vmem:[%s830 + $0x8] sm:$0xff]
    %v833 = vld [vmem:[%s830 + $0x10] sm:$0xff]
    %v834 = vld [vmem:[%s830 + $0x18] sm:$0xff]
    %835 = vmatprep.subr.mxu0 %v66
    %836 = vmatpush1.msra.mxu0 %v65
    %837 = vmatprep.subr.mxu0 %v70
    %838 = vmatpush1.msra.mxu0 %v69
    %839 = vmatprep.subr.mxu0 %v74
    %840 = vmatpush1.msra.mxu0 %v73
    %841 = vmatprep.subr.mxu0 %v78
    %842 = vmatpush1.msra.mxu0 %v77
    %843 = vmatprep.subr.mxu0 %v82
    %844 = vmatpush1.msra.mxu0 %v81
    %845 = vmatprep.subr.mxu0 %v86
    %846 = vmatpush1.msra.mxu0 %v85
    %847 = vmatprep.subr.mxu0 %v90
    %848 = vmatpush1.msra.mxu0 %v89
    %849 = vmatprep.subr.mxu0 %v94
    %850 = vmatpush1.msra.mxu0 %v93
    %851 = vmatprep.subr.mxu0 %v98
    %852 = vmatpush1.msra.mxu0 %v97
    %853 = vmatprep.subr.mxu0 %v102
    %854 = vmatpush1.msra.mxu0 %v101
    %855 = vmatprep.subr.mxu0 %v106
    %856 = vmatpush1.msra.mxu0 %v105
    %857 = vmatprep.subr.mxu0 %v110
    %858 = vmatpush1.msra.mxu0 %v109
    %859 = vmatprep.subr.mxu0 %v114
    %860 = vmatpush1.msra.mxu0 %v113
    %861 = vmatprep.subr.mxu0 %v118
    %862 = vmatpush1.msra.mxu0 %v117
    %863 = vmatprep.subr.mxu0 %v122
    %864 = vmatpush1.msra.mxu0 %v121
    %865 = vmatprep.subr.mxu0 %v126
    %866 = vmatpush1.msra.mxu0 %v125
    %867 = vmatprep.subr.mxu0 0.0
    %868 = vmatpush1.msra.mxu0 0.0
    %869 = vmatprep.subr.mxu0 0.0
    %870 = vmatpush1.msra.mxu0 0.0
    %871 = vmatprep.subr.mxu0 0.0
    %872 = vmatpush1.msra.mxu0 0.0
    %873 = vmatprep.subr.mxu0 0.0
    %874 = vmatpush1.msra.mxu0 0.0
    %875 = vmatprep.subr.mxu0 0.0
    %876 = vmatpush1.msra.mxu0 0.0
    %877 = vmatprep.subr.mxu0 0.0
    %878 = vmatpush1.msra.mxu0 0.0
    %879 = vmatprep.subr.mxu0 0.0
    %880 = vmatpush1.msra.mxu0 0.0
    %881 = vmatprep.subr.mxu0 0.0
    %882 = vmatpush1.msra.mxu0 0.0
    %883 = vmatprep.subr.mxu0 0.0
    %884 = vmatpush1.msra.mxu0 0.0
    %885 = vmatprep.subr.mxu0 0.0
    %886 = vmatpush1.msra.mxu0 0.0
    %887 = vmatprep.subr.mxu0 0.0
    %888 = vmatpush1.msra.mxu0 0.0
    %889 = vmatprep.subr.mxu0 0.0
    %890 = vmatpush1.msra.mxu0 0.0
    %891 = vmatprep.subr.mxu0 0.0
    %892 = vmatpush1.msra.mxu0 0.0
    %893 = vmatprep.subr.mxu0 0.0
    %894 = vmatpush1.msra.mxu0 0.0
    %895 = vmatprep.subr.mxu0 0.0
    %896 = vmatpush1.msra.mxu0 0.0
    %897 = vmatprep.subr.mxu0 0.0
    %898 = vmatpush1.msra.mxu0 0.0
    %899 = vmatprep.mubr.f32.mxu0 0.0
    %900 = vmatmul.mubr.f32.gmra.mrb[0].mxu0 %v829
    %v901 = vpop.f32.mrb[0].mxu0
    %v902 = vadd.f32 0.0, %v901
    %v903 = vpop.f32.mrb[0].mxu0
    %v904 = vadd.f32 0.0, %v903
    %905 = vdwg.mxu0
    %906 = vmatprep.subr.mxu0 %v68
    %907 = vmatpush1.msra.mxu0 %v67
    %908 = vmatprep.subr.mxu0 %v72
    %909 = vmatpush1.msra.mxu0 %v71
    %910 = vmatprep.subr.mxu0 %v76
    %911 = vmatpush1.msra.mxu0 %v75
    %912 = vmatprep.subr.mxu0 %v80
    %913 = vmatpush1.msra.mxu0 %v79
    %914 = vmatprep.subr.mxu0 %v84
    %915 = vmatpush1.msra.mxu0 %v83
    %916 = vmatprep.subr.mxu0 %v88
    %917 = vmatpush1.msra.mxu0 %v87
    %918 = vmatprep.subr.mxu0 %v92
    %919 = vmatpush1.msra.mxu0 %v91
    %920 = vmatprep.subr.mxu0 %v96
    %921 = vmatpush1.msra.mxu0 %v95
    %922 = vmatprep.subr.mxu0 %v100
    %923 = vmatpush1.msra.mxu0 %v99
    %924 = vmatprep.subr.mxu0 %v104
    %925 = vmatpush1.msra.mxu0 %v103
    %926 = vmatprep.subr.mxu0 %v108
    %927 = vmatpush1.msra.mxu0 %v107
    %928 = vmatprep.subr.mxu0 %v112
    %929 = vmatpush1.msra.mxu0 %v111
    %930 = vmatprep.subr.mxu0 %v116
    %931 = vmatpush1.msra.mxu0 %v115
    %932 = vmatprep.subr.mxu0 %v120
    %933 = vmatpush1.msra.mxu0 %v119
    %934 = vmatprep.subr.mxu0 %v124
    %935 = vmatpush1.msra.mxu0 %v123
    %936 = vmatprep.subr.mxu0 %v128
    %937 = vmatpush1.msra.mxu0 %v127
    %938 = vmatprep.subr.mxu0 0.0
    %939 = vmatpush1.msra.mxu0 0.0
    %940 = vmatprep.subr.mxu0 0.0
    %941 = vmatpush1.msra.mxu0 0.0
    %942 = vmatprep.subr.mxu0 0.0
    %943 = vmatpush1.msra.mxu0 0.0
    %944 = vmatprep.subr.mxu0 0.0
    %945 = vmatpush1.msra.mxu0 0.0
    %946 = vmatprep.subr.mxu0 0.0
    %947 = vmatpush1.msra.mxu0 0.0
    %948 = vmatprep.subr.mxu0 0.0
    %949 = vmatpush1.msra.mxu0 0.0
    %950 = vmatprep.subr.mxu0 0.0
    %951 = vmatpush1.msra.mxu0 0.0
    %952 = vmatprep.subr.mxu0 0.0
    %953 = vmatpush1.msra.mxu0 0.0
    %954 = vmatprep.subr.mxu0 0.0
    %955 = vmatpush1.msra.mxu0 0.0
    %956 = vmatprep.subr.mxu0 0.0
    %957 = vmatpush1.msra.mxu0 0.0
    %958 = vmatprep.subr.mxu0 0.0
    %959 = vmatpush1.msra.mxu0 0.0
    %960 = vmatprep.subr.mxu0 0.0
    %961 = vmatpush1.msra.mxu0 0.0
    %962 = vmatprep.subr.mxu0 0.0
    %963 = vmatpush1.msra.mxu0 0.0
    %964 = vmatprep.subr.mxu0 0.0
    %965 = vmatpush1.msra.mxu0 0.0
    %966 = vmatprep.subr.mxu0 0.0
    %967 = vmatpush1.msra.mxu0 0.0
    %968 = vmatprep.subr.mxu0 0.0
    %969 = vmatpush1.msra.mxu0 0.0
    %970 = vmatprep.mubr.f32.mxu0 0.0
    %971 = vmatmul.mubr.f32.gmra.mrb[0].mxu0 %v829
    %v972 = vpop.f32.mrb[0].mxu0
    %v973 = vadd.f32 0.0, %v972
    %v974 = vpop.f32.mrb[0].mxu0
    %v975 = vadd.f32 0.0, %v974
    %976 = vdwg.mxu0
    %v977 = vadd.f32 %v831, %v902
    %v978 = vadd.f32 %v832, %v904
    %v979 = vadd.f32 %v833, %v973
    %v980 = vadd.f32 %v834, %v975
    %v981 = vxor.u32 %v977, 2147483648
    %v982 = vxor.u32 %v978, 2147483648
    %v983 = vxor.u32 %v979, 2147483648
    %v984 = vmul.f32 %v981, 1.442695
    %v985 = vpow.pop %v984
    %v986 = vmul.f32 %v982, 1.442695
    %v987 = vpow.pop %v986
    %v988 = vmul.f32 %v983, 1.442695
    %v989 = vpow.pop %v988
    %v990 = vadd.f32 %v985, 1.0
    %v991 = vadd.f32 %v987, 1.0
    %v992 = vadd.f32 %v989, 1.0
    %v993 = vrcp.pop %v990
    %v994 = vmul.f32 1.0, %v993
    %v995 = vrcp.pop %v991
    %v996 = vmul.f32 1.0, %v995
    %v997 = vrcp.pop %v992
    %v998 = vmul.f32 1.0, %v997
    %v999 = vtanh.pop %v980
    %v1000 = vmul.f32 %v996, %v827
    %v1001 = vmul.f32 %v994, %v999
    %v1002 = vadd.f32 %v1000, %v1001
    %v1003 = vtanh.pop %v1002
    %v1004 = vmul.f32 %v998, %v1003
    %s1005 = scalar_lea.vmem [#allocation4], 160
    %v1006 = vld [vmem:[%s1005] sm:$0xff]
    %v1007 = vld [vmem:[%s1005 + $0x8] sm:$0xff]
    %v1008 = vld [vmem:[%s1005 + $0x10] sm:$0xff]
    %v1009 = vld [vmem:[%s1005 + $0x18] sm:$0xff]
    %1010 = vmatprep.subr.mxu0 %v66
    %1011 = vmatpush1.msra.mxu0 %v65
    %1012 = vmatprep.subr.mxu0 %v70
    %1013 = vmatpush1.msra.mxu0 %v69
    %1014 = vmatprep.subr.mxu0 %v74
    %1015 = vmatpush1.msra.mxu0 %v73
    %1016 = vmatprep.subr.mxu0 %v78
    %1017 = vmatpush1.msra.mxu0 %v77
    %1018 = vmatprep.subr.mxu0 %v82
    %1019 = vmatpush1.msra.mxu0 %v81
    %1020 = vmatprep.subr.mxu0 %v86
    %1021 = vmatpush1.msra.mxu0 %v85
    %1022 = vmatprep.subr.mxu0 %v90
    %1023 = vmatpush1.msra.mxu0 %v89
    %1024 = vmatprep.subr.mxu0 %v94
    %1025 = vmatpush1.msra.mxu0 %v93
    %1026 = vmatprep.subr.mxu0 %v98
    %1027 = vmatpush1.msra.mxu0 %v97
    %1028 = vmatprep.subr.mxu0 %v102
    %1029 = vmatpush1.msra.mxu0 %v101
    %1030 = vmatprep.subr.mxu0 %v106
    %1031 = vmatpush1.msra.mxu0 %v105
    %1032 = vmatprep.subr.mxu0 %v110
    %1033 = vmatpush1.msra.mxu0 %v109
    %1034 = vmatprep.subr.mxu0 %v114
    %1035 = vmatpush1.msra.mxu0 %v113
    %1036 = vmatprep.subr.mxu0 %v118
    %1037 = vmatpush1.msra.mxu0 %v117
    %1038 = vmatprep.subr.mxu0 %v122
    %1039 = vmatpush1.msra.mxu0 %v121
    %1040 = vmatprep.subr.mxu0 %v126
    %1041 = vmatpush1.msra.mxu0 %v125
    %1042 = vmatprep.subr.mxu0 0.0
    %1043 = vmatpush1.msra.mxu0 0.0
    %1044 = vmatprep.subr.mxu0 0.0
    %1045 = vmatpush1.msra.mxu0 0.0
    %1046 = vmatprep.subr.mxu0 0.0
    %1047 = vmatpush1.msra.mxu0 0.0
    %1048 = vmatprep.subr.mxu0 0.0
    %1049 = vmatpush1.msra.mxu0 0.0
    %1050 = vmatprep.subr.mxu0 0.0
    %1051 = vmatpush1.msra.mxu0 0.0
    %1052 = vmatprep.subr.mxu0 0.0
    %1053 = vmatpush1.msra.mxu0 0.0
    %1054 = vmatprep.subr.mxu0 0.0
    %1055 = vmatpush1.msra.mxu0 0.0
    %1056 = vmatprep.subr.mxu0 0.0
    %1057 = vmatpush1.msra.mxu0 0.0
    %1058 = vmatprep.subr.mxu0 0.0
    %1059 = vmatpush1.msra.mxu0 0.0
    %1060 = vmatprep.subr.mxu0 0.0
    %1061 = vmatpush1.msra.mxu0 0.0
    %1062 = vmatprep.subr.mxu0 0.0
    %1063 = vmatpush1.msra.mxu0 0.0
    %1064 = vmatprep.subr.mxu0 0.0
    %1065 = vmatpush1.msra.mxu0 0.0
    %1066 = vmatprep.subr.mxu0 0.0
    %1067 = vmatpush1.msra.mxu0 0.0
    %1068 = vmatprep.subr.mxu0 0.0
    %1069 = vmatpush1.msra.mxu0 0.0
    %1070 = vmatprep.subr.mxu0 0.0
    %1071 = vmatpush1.msra.mxu0 0.0
    %1072 = vmatprep.subr.mxu0 0.0
    %1073 = vmatpush1.msra.mxu0 0.0
    %1074 = vmatprep.mubr.f32.mxu0 0.0
    %1075 = vmatmul.mubr.f32.gmra.mrb[0].mxu0 %v1004
    %v1076 = vpop.f32.mrb[0].mxu0
    %v1077 = vadd.f32 0.0, %v1076
    %v1078 = vpop.f32.mrb[0].mxu0
    %v1079 = vadd.f32 0.0, %v1078
    %1080 = vdwg.mxu0
    %1081 = vmatprep.subr.mxu0 %v68
    %1082 = vmatpush1.msra.mxu0 %v67
    %1083 = vmatprep.subr.mxu0 %v72
    %1084 = vmatpush1.msra.mxu0 %v71
    %1085 = vmatprep.subr.mxu0 %v76
    %1086 = vmatpush1.msra.mxu0 %v75
    %1087 = vmatprep.subr.mxu0 %v80
    %1088 = vmatpush1.msra.mxu0 %v79
    %1089 = vmatprep.subr.mxu0 %v84
    %1090 = vmatpush1.msra.mxu0 %v83
    %1091 = vmatprep.subr.mxu0 %v88
    %1092 = vmatpush1.msra.mxu0 %v87
    %1093 = vmatprep.subr.mxu0 %v92
    %1094 = vmatpush1.msra.mxu0 %v91
    %1095 = vmatprep.subr.mxu0 %v96
    %1096 = vmatpush1.msra.mxu0 %v95
    %1097 = vmatprep.subr.mxu0 %v100
    %1098 = vmatpush1.msra.mxu0 %v99
    %1099 = vmatprep.subr.mxu0 %v104
    %1100 = vmatpush1.msra.mxu0 %v103
    %1101 = vmatprep.subr.mxu0 %v108
    %1102 = vmatpush1.msra.mxu0 %v107
    %1103 = vmatprep.subr.mxu0 %v112
    %1104 = vmatpush1.msra.mxu0 %v111
    %1105 = vmatprep.subr.mxu0 %v116
    %1106 = vmatpush1.msra.mxu0 %v115
    %1107 = vmatprep.subr.mxu0 %v120
    %1108 = vmatpush1.msra.mxu0 %v119
    %1109 = vmatprep.subr.mxu0 %v124
    %1110 = vmatpush1.msra.mxu0 %v123
    %1111 = vmatprep.subr.mxu0 %v128
    %1112 = vmatpush1.msra.mxu0 %v127
    %1113 = vmatprep.subr.mxu0 0.0
    %1114 = vmatpush1.msra.mxu0 0.0
    %1115 = vmatprep.subr.mxu0 0.0
    %1116 = vmatpush1.msra.mxu0 0.0
    %1117 = vmatprep.subr.mxu0 0.0
    %1118 = vmatpush1.msra.mxu0 0.0
    %1119 = vmatprep.subr.mxu0 0.0
    %1120 = vmatpush1.msra.mxu0 0.0
    %1121 = vmatprep.subr.mxu0 0.0
    %1122 = vmatpush1.msra.mxu0 0.0
    %1123 = vmatprep.subr.mxu0 0.0
    %1124 = vmatpush1.msra.mxu0 0.0
    %1125 = vmatprep.subr.mxu0 0.0
    %1126 = vmatpush1.msra.mxu0 0.0
    %1127 = vmatprep.subr.mxu0 0.0
    %1128 = vmatpush1.msra.mxu0 0.0
    %1129 = vmatprep.subr.mxu0 0.0
    %1130 = vmatpush1.msra.mxu0 0.0
    %1131 = vmatprep.subr.mxu0 0.0
    %1132 = vmatpush1.msra.mxu0 0.0
    %1133 = vmatprep.subr.mxu0 0.0
    %1134 = vmatpush1.msra.mxu0 0.0
    %1135 = vmatprep.subr.mxu0 0.0
    %1136 = vmatpush1.msra.mxu0 0.0
    %1137 = vmatprep.subr.mxu0 0.0
    %1138 = vmatpush1.msra.mxu0 0.0
    %1139 = vmatprep.subr.mxu0 0.0
    %1140 = vmatpush1.msra.mxu0 0.0
    %1141 = vmatprep.subr.mxu0 0.0
    %1142 = vmatpush1.msra.mxu0 0.0
    %1143 = vmatprep.subr.mxu0 0.0
    %1144 = vmatpush1.msra.mxu0 0.0
    %1145 = vmatprep.mubr.f32.mxu0 0.0
    %1146 = vmatmul.mubr.f32.gmra.mrb[0].mxu0 %v1004
    %v1147 = vpop.f32.mrb[0].mxu0
    %v1148 = vadd.f32 0.0, %v1147
    %v1149 = vpop.f32.mrb[0].mxu0
    %v1150 = vadd.f32 0.0, %v1149
    %1151 = vdwg.mxu0
    %v1152 = vadd.f32 %v1006, %v1077
    %v1153 = vadd.f32 %v1007, %v1079
    %v1154 = vadd.f32 %v1008, %v1148
    %v1155 = vadd.f32 %v1009, %v1150
    %v1156 = vxor.u32 %v1152, 2147483648
    %v1157 = vxor.u32 %v1153, 2147483648
    %v1158 = vxor.u32 %v1154, 2147483648
    %v1159 = vmul.f32 %v1156, 1.442695
    %v1160 = vpow.pop %v1159
    %v1161 = vmul.f32 %v1157, 1.442695
    %v1162 = vpow.pop %v1161
    %v1163 = vmul.f32 %v1158, 1.442695
    %v1164 = vpow.pop %v1163
    %v1165 = vadd.f32 %v1160, 1.0
    %v1166 = vadd.f32 %v1162, 1.0
    %v1167 = vadd.f32 %v1164, 1.0
    %v1168 = vrcp.pop %v1165
    %v1169 = vmul.f32 1.0, %v1168
    %v1170 = vrcp.pop %v1166
    %v1171 = vmul.f32 1.0, %v1170
    %v1172 = vrcp.pop %v1167
    %v1173 = vmul.f32 1.0, %v1172
    %v1174 = vtanh.pop %v1155
    %v1175 = vmul.f32 %v1171, %v1002
    %v1176 = vmul.f32 %v1169, %v1174
    %v1177 = vadd.f32 %v1175, %v1176
    %v1178 = vtanh.pop %v1177
    %v1179 = vmul.f32 %v1173, %v1178
    %s1180 = scalar_lea.vmem [#allocation4], 192
    %v1181 = vld [vmem:[%s1180] sm:$0xff]
    %v1182 = vld [vmem:[%s1180 + $0x8] sm:$0xff]
    %v1183 = vld [vmem:[%s1180 + $0x10] sm:$0xff]
    %v1184 = vld [vmem:[%s1180 + $0x18] sm:$0xff]
    %1185 = vmatprep.subr.mxu0 %v66
    %1186 = vmatpush1.msra.mxu0 %v65
    %1187 = vmatprep.subr.mxu0 %v70
    %1188 = vmatpush1.msra.mxu0 %v69
    %1189 = vmatprep.subr.mxu0 %v74
    %1190 = vmatpush1.msra.mxu0 %v73
    %1191 = vmatprep.subr.mxu0 %v78
    %1192 = vmatpush1.msra.mxu0 %v77
    %1193 = vmatprep.subr.mxu0 %v82
    %1194 = vmatpush1.msra.mxu0 %v81
    %1195 = vmatprep.subr.mxu0 %v86
    %1196 = vmatpush1.msra.mxu0 %v85
    %1197 = vmatprep.subr.mxu0 %v90
    %1198 = vmatpush1.msra.mxu0 %v89
    %1199 = vmatprep.subr.mxu0 %v94
    %1200 = vmatpush1.msra.mxu0 %v93
    %1201 = vmatprep.subr.mxu0 %v98
    %1202 = vmatpush1.msra.mxu0 %v97
    %1203 = vmatprep.subr.mxu0 %v102
    %1204 = vmatpush1.msra.mxu0 %v101
    %1205 = vmatprep.subr.mxu0 %v106
    %1206 = vmatpush1.msra.mxu0 %v105
    %1207 = vmatprep.subr.mxu0 %v110
    %1208 = vmatpush1.msra.mxu0 %v109
    %1209 = vmatprep.subr.mxu0 %v114
    %1210 = vmatpush1.msra.mxu0 %v113
    %1211 = vmatprep.subr.mxu0 %v118
    %1212 = vmatpush1.msra.mxu0 %v117
    %1213 = vmatprep.subr.mxu0 %v122
    %1214 = vmatpush1.msra.mxu0 %v121
    %1215 = vmatprep.subr.mxu0 %v126
    %1216 = vmatpush1.msra.mxu0 %v125
    %1217 = vmatprep.subr.mxu0 0.0
    %1218 = vmatpush1.msra.mxu0 0.0
    %1219 = vmatprep.subr.mxu0 0.0
    %1220 = vmatpush1.msra.mxu0 0.0
    %1221 = vmatprep.subr.mxu0 0.0
    %1222 = vmatpush1.msra.mxu0 0.0
    %1223 = vmatprep.subr.mxu0 0.0
    %1224 = vmatpush1.msra.mxu0 0.0
    %1225 = vmatprep.subr.mxu0 0.0
    %1226 = vmatpush1.msra.mxu0 0.0
    %1227 = vmatprep.subr.mxu0 0.0
    %1228 = vmatpush1.msra.mxu0 0.0
    %1229 = vmatprep.subr.mxu0 0.0
    %1230 = vmatpush1.msra.mxu0 0.0
    %1231 = vmatprep.subr.mxu0 0.0
    %1232 = vmatpush1.msra.mxu0 0.0
    %1233 = vmatprep.subr.mxu0 0.0
    %1234 = vmatpush1.msra.mxu0 0.0
    %1235 = vmatprep.subr.mxu0 0.0
    %1236 = vmatpush1.msra.mxu0 0.0
    %1237 = vmatprep.subr.mxu0 0.0
    %1238 = vmatpush1.msra.mxu0 0.0
    %1239 = vmatprep.subr.mxu0 0.0
    %1240 = vmatpush1.msra.mxu0 0.0
    %1241 = vmatprep.subr.mxu0 0.0
    %1242 = vmatpush1.msra.mxu0 0.0
    %1243 = vmatprep.subr.mxu0 0.0
    %1244 = vmatpush1.msra.mxu0 0.0
    %1245 = vmatprep.subr.mxu0 0.0
    %1246 = vmatpush1.msra.mxu0 0.0
    %1247 = vmatprep.subr.mxu0 0.0
    %1248 = vmatpush1.msra.mxu0 0.0
    %1249 = vmatprep.mubr.f32.mxu0 0.0
    %1250 = vmatmul.mubr.f32.gmra.mrb[0].mxu0 %v1179
    %v1251 = vpop.f32.mrb[0].mxu0
    %v1252 = vadd.f32 0.0, %v1251
    %v1253 = vpop.f32.mrb[0].mxu0
    %v1254 = vadd.f32 0.0, %v1253
    %1255 = vdwg.mxu0
    %1256 = vmatprep.subr.mxu0 %v68
    %1257 = vmatpush1.msra.mxu0 %v67
    %1258 = vmatprep.subr.mxu0 %v72
    %1259 = vmatpush1.msra.mxu0 %v71
    %1260 = vmatprep.subr.mxu0 %v76
    %1261 = vmatpush1.msra.mxu0 %v75
    %1262 = vmatprep.subr.mxu0 %v80
    %1263 = vmatpush1.msra.mxu0 %v79
    %1264 = vmatprep.subr.mxu0 %v84
    %1265 = vmatpush1.msra.mxu0 %v83
    %1266 = vmatprep.subr.mxu0 %v88
    %1267 = vmatpush1.msra.mxu0 %v87
    %1268 = vmatprep.subr.mxu0 %v92
    %1269 = vmatpush1.msra.mxu0 %v91
    %1270 = vmatprep.subr.mxu0 %v96
    %1271 = vmatpush1.msra.mxu0 %v95
    %1272 = vmatprep.subr.mxu0 %v100
    %1273 = vmatpush1.msra.mxu0 %v99
    %1274 = vmatprep.subr.mxu0 %v104
    %1275 = vmatpush1.msra.mxu0 %v103
    %1276 = vmatprep.subr.mxu0 %v108
    %1277 = vmatpush1.msra.mxu0 %v107
    %1278 = vmatprep.subr.mxu0 %v112
    %1279 = vmatpush1.msra.mxu0 %v111
    %1280 = vmatprep.subr.mxu0 %v116
    %1281 = vmatpush1.msra.mxu0 %v115
    %1282 = vmatprep.subr.mxu0 %v120
    %1283 = vmatpush1.msra.mxu0 %v119
    %1284 = vmatprep.subr.mxu0 %v124
    %1285 = vmatpush1.msra.mxu0 %v123
    %1286 = vmatprep.subr.mxu0 %v128
    %1287 = vmatpush1.msra.mxu0 %v127
    %1288 = vmatprep.subr.mxu0 0.0
    %1289 = vmatpush1.msra.mxu0 0.0
    %1290 = vmatprep.subr.mxu0 0.0
    %1291 = vmatpush1.msra.mxu0 0.0
    %1292 = vmatprep.subr.mxu0 0.0
    %1293 = vmatpush1.msra.mxu0 0.0
    %1294 = vmatprep.subr.mxu0 0.0
    %1295 = vmatpush1.msra.mxu0 0.0
    %1296 = vmatprep.subr.mxu0 0.0
    %1297 = vmatpush1.msra.mxu0 0.0
    %1298 = vmatprep.subr.mxu0 0.0
    %1299 = vmatpush1.msra.mxu0 0.0
    %1300 = vmatprep.subr.mxu0 0.0
    %1301 = vmatpush1.msra.mxu0 0.0
    %1302 = vmatprep.subr.mxu0 0.0
    %1303 = vmatpush1.msra.mxu0 0.0
    %1304 = vmatprep.subr.mxu0 0.0
    %1305 = vmatpush1.msra.mxu0 0.0
    %1306 = vmatprep.subr.mxu0 0.0
    %1307 = vmatpush1.msra.mxu0 0.0
    %1308 = vmatprep.subr.mxu0 0.0
    %1309 = vmatpush1.msra.mxu0 0.0
    %1310 = vmatprep.subr.mxu0 0.0
    %1311 = vmatpush1.msra.mxu0 0.0
    %1312 = vmatprep.subr.mxu0 0.0
    %1313 = vmatpush1.msra.mxu0 0.0
    %1314 = vmatprep.subr.mxu0 0.0
    %1315 = vmatpush1.msra.mxu0 0.0
    %1316 = vmatprep.subr.mxu0 0.0
    %1317 = vmatpush1.msra.mxu0 0.0
    %1318 = vmatprep.subr.mxu0 0.0
    %1319 = vmatpush1.msra.mxu0 0.0
    %1320 = vmatprep.mubr.f32.mxu0 0.0
    %1321 = vmatmul.mubr.f32.gmra.mrb[0].mxu0 %v1179
    %v1322 = vpop.f32.mrb[0].mxu0
    %v1323 = vadd.f32 0.0, %v1322
    %v1324 = vpop.f32.mrb[0].mxu0
    %v1325 = vadd.f32 0.0, %v1324
    %1326 = vdwg.mxu0
    %v1327 = vadd.f32 %v1181, %v1252
    %v1328 = vadd.f32 %v1182, %v1254
    %v1329 = vadd.f32 %v1183, %v1323
    %v1330 = vadd.f32 %v1184, %v1325
    %v1331 = vxor.u32 %v1327, 2147483648
    %v1332 = vxor.u32 %v1328, 2147483648
    %v1333 = vxor.u32 %v1329, 2147483648
    %v1334 = vmul.f32 %v1331, 1.442695
    %v1335 = vpow.pop %v1334
    %v1336 = vmul.f32 %v1332, 1.442695
    %v1337 = vpow.pop %v1336
    %v1338 = vmul.f32 %v1333, 1.442695
    %v1339 = vpow.pop %v1338
    %v1340 = vadd.f32 %v1335, 1.0
    %v1341 = vadd.f32 %v1337, 1.0
    %v1342 = vadd.f32 %v1339, 1.0
    %v1343 = vrcp.pop %v1340
    %v1344 = vmul.f32 1.0, %v1343
    %v1345 = vrcp.pop %v1341
    %v1346 = vmul.f32 1.0, %v1345
    %v1347 = vrcp.pop %v1342
    %v1348 = vmul.f32 1.0, %v1347
    %v1349 = vtanh.pop %v1330
    %v1350 = vmul.f32 %v1346, %v1177
    %v1351 = vmul.f32 %v1344, %v1349
    %v1352 = vadd.f32 %v1350, %v1351
    %v1353 = vtanh.pop %v1352
    %v1354 = vmul.f32 %v1348, %v1353
    %s1355 = scalar_lea.vmem [#allocation4], 224
    %v1356 = vld [vmem:[%s1355] sm:$0xff]
    %v1357 = vld [vmem:[%s1355 + $0x8] sm:$0xff]
    %v1358 = vld [vmem:[%s1355 + $0x10] sm:$0xff]
    %v1359 = vld [vmem:[%s1355 + $0x18] sm:$0xff]
    %1360 = vmatprep.subr.mxu0 %v66
    %1361 = vmatpush1.msra.mxu0 %v65
    %1362 = vmatprep.subr.mxu0 %v70
    %1363 = vmatpush1.msra.mxu0 %v69
    %1364 = vmatprep.subr.mxu0 %v74
    %1365 = vmatpush1.msra.mxu0 %v73
    %1366 = vmatprep.subr.mxu0 %v78
    %1367 = vmatpush1.msra.mxu0 %v77
    %1368 = vmatprep.subr.mxu0 %v82
    %1369 = vmatpush1.msra.mxu0 %v81
    %1370 = vmatprep.subr.mxu0 %v86
    %1371 = vmatpush1.msra.mxu0 %v85
    %1372 = vmatprep.subr.mxu0 %v90
    %1373 = vmatpush1.msra.mxu0 %v89
    %1374 = vmatprep.subr.mxu0 %v94
    %1375 = vmatpush1.msra.mxu0 %v93
    %1376 = vmatprep.subr.mxu0 %v98
    %1377 = vmatpush1.msra.mxu0 %v97
    %1378 = vmatprep.subr.mxu0 %v102
    %1379 = vmatpush1.msra.mxu0 %v101
    %1380 = vmatprep.subr.mxu0 %v106
    %1381 = vmatpush1.msra.mxu0 %v105
    %1382 = vmatprep.subr.mxu0 %v110
    %1383 = vmatpush1.msra.mxu0 %v109
    %1384 = vmatprep.subr.mxu0 %v114
    %1385 = vmatpush1.msra.mxu0 %v113
    %1386 = vmatprep.subr.mxu0 %v118
    %1387 = vmatpush1.msra.mxu0 %v117
    %1388 = vmatprep.subr.mxu0 %v122
    %1389 = vmatpush1.msra.mxu0 %v121
    %1390 = vmatprep.subr.mxu0 %v126
    %1391 = vmatpush1.msra.mxu0 %v125
    %1392 = vmatprep.subr.mxu0 0.0
    %1393 = vmatpush1.msra.mxu0 0.0
    %1394 = vmatprep.subr.mxu0 0.0
    %1395 = vmatpush1.msra.mxu0 0.0
    %1396 = vmatprep.subr.mxu0 0.0
    %1397 = vmatpush1.msra.mxu0 0.0
    %1398 = vmatprep.subr.mxu0 0.0
    %1399 = vmatpush1.msra.mxu0 0.0
    %1400 = vmatprep.subr.mxu0 0.0
    %1401 = vmatpush1.msra.mxu0 0.0
    %1402 = vmatprep.subr.mxu0 0.0
    %1403 = vmatpush1.msra.mxu0 0.0
    %1404 = vmatprep.subr.mxu0 0.0
    %1405 = vmatpush1.msra.mxu0 0.0
    %1406 = vmatprep.subr.mxu0 0.0
    %1407 = vmatpush1.msra.mxu0 0.0
    %1408 = vmatprep.subr.mxu0 0.0
    %1409 = vmatpush1.msra.mxu0 0.0
    %1410 = vmatprep.subr.mxu0 0.0
    %1411 = vmatpush1.msra.mxu0 0.0
    %1412 = vmatprep.subr.mxu0 0.0
    %1413 = vmatpush1.msra.mxu0 0.0
    %1414 = vmatprep.subr.mxu0 0.0
    %1415 = vmatpush1.msra.mxu0 0.0
    %1416 = vmatprep.subr.mxu0 0.0
    %1417 = vmatpush1.msra.mxu0 0.0
    %1418 = vmatprep.subr.mxu0 0.0
    %1419 = vmatpush1.msra.mxu0 0.0
    %1420 = vmatprep.subr.mxu0 0.0
    %1421 = vmatpush1.msra.mxu0 0.0
    %1422 = vmatprep.subr.mxu0 0.0
    %1423 = vmatpush1.msra.mxu0 0.0
    %1424 = vmatprep.mubr.f32.mxu0 0.0
    %1425 = vmatmul.mubr.f32.gmra.mrb[0].mxu0 %v1354
    %v1426 = vpop.f32.mrb[0].mxu0
    %v1427 = vadd.f32 0.0, %v1426
    %v1428 = vpop.f32.mrb[0].mxu0
    %v1429 = vadd.f32 0.0, %v1428
    %1430 = vdwg.mxu0
    %1431 = vmatprep.subr.mxu0 %v68
    %1432 = vmatpush1.msra.mxu0 %v67
    %1433 = vmatprep.subr.mxu0 %v72
    %1434 = vmatpush1.msra.mxu0 %v71
    %1435 = vmatprep.subr.mxu0 %v76
    %1436 = vmatpush1.msra.mxu0 %v75
    %1437 = vmatprep.subr.mxu0 %v80
    %1438 = vmatpush1.msra.mxu0 %v79
    %1439 = vmatprep.subr.mxu0 %v84
    %1440 = vmatpush1.msra.mxu0 %v83
    %1441 = vmatprep.subr.mxu0 %v88
    %1442 = vmatpush1.msra.mxu0 %v87
    %1443 = vmatprep.subr.mxu0 %v92
    %1444 = vmatpush1.msra.mxu0 %v91
    %1445 = vmatprep.subr.mxu0 %v96
    %1446 = vmatpush1.msra.mxu0 %v95
    %1447 = vmatprep.subr.mxu0 %v100
    %1448 = vmatpush1.msra.mxu0 %v99
    %1449 = vmatprep.subr.mxu0 %v104
    %1450 = vmatpush1.msra.mxu0 %v103
    %1451 = vmatprep.subr.mxu0 %v108
    %1452 = vmatpush1.msra.mxu0 %v107
    %1453 = vmatprep.subr.mxu0 %v112
    %1454 = vmatpush1.msra.mxu0 %v111
    %1455 = vmatprep.subr.mxu0 %v116
    %1456 = vmatpush1.msra.mxu0 %v115
    %1457 = vmatprep.subr.mxu0 %v120
    %1458 = vmatpush1.msra.mxu0 %v119
    %1459 = vmatprep.subr.mxu0 %v124
    %1460 = vmatpush1.msra.mxu0 %v123
    %1461 = vmatprep.subr.mxu0 %v128
    %1462 = vmatpush1.msra.mxu0 %v127
    %1463 = vmatprep.subr.mxu0 0.0
    %1464 = vmatpush1.msra.mxu0 0.0
    %1465 = vmatprep.subr.mxu0 0.0
    %1466 = vmatpush1.msra.mxu0 0.0
    %1467 = vmatprep.subr.mxu0 0.0
    %1468 = vmatpush1.msra.mxu0 0.0
    %1469 = vmatprep.subr.mxu0 0.0
    %1470 = vmatpush1.msra.mxu0 0.0
    %1471 = vmatprep.subr.mxu0 0.0
    %1472 = vmatpush1.msra.mxu0 0.0
    %1473 = vmatprep.subr.mxu0 0.0
    %1474 = vmatpush1.msra.mxu0 0.0
    %1475 = vmatprep.subr.mxu0 0.0
    %1476 = vmatpush1.msra.mxu0 0.0
    %1477 = vmatprep.subr.mxu0 0.0
    %1478 = vmatpush1.msra.mxu0 0.0
    %1479 = vmatprep.subr.mxu0 0.0
    %1480 = vmatpush1.msra.mxu0 0.0
    %1481 = vmatprep.subr.mxu0 0.0
    %1482 = vmatpush1.msra.mxu0 0.0
    %1483 = vmatprep.subr.mxu0 0.0
    %1484 = vmatpush1.msra.mxu0 0.0
    %1485 = vmatprep.subr.mxu0 0.0
    %1486 = vmatpush1.msra.mxu0 0.0
    %1487 = vmatprep.subr.mxu0 0.0
    %1488 = vmatpush1.msra.mxu0 0.0
    %1489 = vmatprep.subr.mxu0 0.0
    %1490 = vmatpush1.msra.mxu0 0.0
    %1491 = vmatprep.subr.mxu0 0.0
    %1492 = vmatpush1.msra.mxu0 0.0
    %1493 = vmatprep.subr.mxu0 0.0
    %1494 = vmatpush1.msra.mxu0 0.0
    %1495 = vmatprep.mubr.f32.mxu0 0.0
    %1496 = vmatmul.mubr.f32.gmra.mrb[0].mxu0 %v1354
    %v1497 = vpop.f32.mrb[0].mxu0
    %v1498 = vadd.f32 0.0, %v1497
    %v1499 = vpop.f32.mrb[0].mxu0
    %v1500 = vadd.f32 0.0, %v1499
    %1501 = vdwg.mxu0
    %v1502 = vadd.f32 %v1356, %v1427
    %v1503 = vadd.f32 %v1357, %v1429
    %v1504 = vadd.f32 %v1358, %v1498
    %v1505 = vadd.f32 %v1359, %v1500
    %v1506 = vxor.u32 %v1502, 2147483648
    %v1507 = vxor.u32 %v1503, 2147483648
    %v1508 = vxor.u32 %v1504, 2147483648
    %v1509 = vmul.f32 %v1506, 1.442695
    %v1510 = vpow.pop %v1509
    %v1511 = vmul.f32 %v1507, 1.442695
    %v1512 = vpow.pop %v1511
    %v1513 = vmul.f32 %v1508, 1.442695
    %v1514 = vpow.pop %v1513
    %v1515 = vadd.f32 %v1510, 1.0
    %v1516 = vadd.f32 %v1512, 1.0
    %v1517 = vadd.f32 %v1514, 1.0
    %v1518 = vrcp.pop %v1515
    %v1519 = vmul.f32 1.0, %v1518
    %v1520 = vrcp.pop %v1516
    %v1521 = vmul.f32 1.0, %v1520
    %v1522 = vrcp.pop %v1517
    %v1523 = vmul.f32 1.0, %v1522
    %v1524 = vtanh.pop %v1505
    %v1525 = vmul.f32 %v1521, %v1352
    %v1526 = vmul.f32 %v1519, %v1524
    %v1527 = vadd.f32 %v1525, %v1526
    %v1528 = vtanh.pop %v1527
    %v1529 = vmul.f32 %v1523, %v1528
    %1530 = vst [vmem:[#allocation2] sm:$0xff] %v1529
    %1531 = vst [vmem:[#allocation3] sm:$0xff] %v1527
    // Predicated region
    $region34: #{tpu_custom_call.1} parent=1 // pred_check
      %p1532 = pneg %p59
    $region35: #{tpu_custom_call.1} parent=1 // pred_check_branch
      %1534 = sbr.rel (%p1532) target = $region37
    $region36: #{tpu_custom_call.1} parent=1 // pred_region
      %v1535 = vld [vmem:[#allocation9] sm:$0xff]
      %v1536 = vld [vmem:[#allocation9 + $0x8] sm:$0xff]
      %v1537 = vld [vmem:[#allocation9 + $0x10] sm:$0xff]
      %v1538 = vld [vmem:[#allocation9 + $0x18] sm:$0xff]
      %v1539 = vld [vmem:[#allocation9 + $0x20] sm:$0xff]
      %v1540 = vld [vmem:[#allocation9 + $0x28] sm:$0xff]
      %v1541 = vld [vmem:[#allocation9 + $0x30] sm:$0xff]
      %v1542 = vld [vmem:[#allocation9 + $0x38] sm:$0xff]
      %v1543 = vld [vmem:[#allocation9 + $0x40] sm:$0xff]
      %v1544 = vld [vmem:[#allocation9 + $0x48] sm:$0xff]
      %v1545 = vld [vmem:[#allocation9 + $0x50] sm:$0xff]
      %v1546 = vld [vmem:[#allocation9 + $0x58] sm:$0xff]
      %v1547 = vld [vmem:[#allocation9 + $0x60] sm:$0xff]
      %v1548 = vld [vmem:[#allocation9 + $0x68] sm:$0xff]
      %v1549 = vld [vmem:[#allocation9 + $0x70] sm:$0xff]
      %v1550 = vld [vmem:[#allocation9 + $0x78] sm:$0xff]
      %v1551 = vld [vmem:[%s3] sm:$0x1]
      %v1553 = vlaneseq
      %v1554 = vshrl.u32 %v1553, 7
      %v1555 = vsub.s32 0, %v1554
      %v1556 = vrot.slane %v1551, %v1555
      %1558 = vmatprep.subr.mxu0 0.0
      %1559 = vmatpush1.msra.mxu0 %v1535
      %1560 = vmatprep.subr.mxu0 0.0
      %1561 = vmatpush1.msra.mxu0 %v1536
      %1562 = vmatprep.subr.mxu0 0.0
      %1563 = vmatpush1.msra.mxu0 %v1537
      %1564 = vmatprep.subr.mxu0 0.0
      %1565 = vmatpush1.msra.mxu0 %v1538
      %1566 = vmatprep.subr.mxu0 0.0
      %1567 = vmatpush1.msra.mxu0 %v1539
      %1568 = vmatprep.subr.mxu0 0.0
      %1569 = vmatpush1.msra.mxu0 %v1540
      %1570 = vmatprep.subr.mxu0 0.0
      %1571 = vmatpush1.msra.mxu0 %v1541
      %1572 = vmatprep.subr.mxu0 0.0
      %1573 = vmatpush1.msra.mxu0 %v1542
      %1574 = vmatprep.subr.mxu0 0.0
      %1575 = vmatpush1.msra.mxu0 %v1543
      %1576 = vmatprep.subr.mxu0 0.0
      %1577 = vmatpush1.msra.mxu0 %v1544
      %1578 = vmatprep.subr.mxu0 0.0
      %1579 = vmatpush1.msra.mxu0 %v1545
      %1580 = vmatprep.subr.mxu0 0.0
      %1581 = vmatpush1.msra.mxu0 %v1546
      %1582 = vmatprep.subr.mxu0 0.0
      %1583 = vmatpush1.msra.mxu0 %v1547
      %1584 = vmatprep.subr.mxu0 0.0
      %1585 = vmatpush1.msra.mxu0 %v1548
      %1586 = vmatprep.subr.mxu0 0.0
      %1587 = vmatpush1.msra.mxu0 %v1549
      %1588 = vmatprep.subr.mxu0 0.0
      %1589 = vmatpush1.msra.mxu0 %v1550
      %1590 = vmatprep.subr.mxu0 0.0
      %1591 = vmatpush1.msra.mxu0 0.0
      %1592 = vmatprep.subr.mxu0 0.0
      %1593 = vmatpush1.msra.mxu0 0.0
      %1594 = vmatprep.subr.mxu0 0.0
      %1595 = vmatpush1.msra.mxu0 0.0
      %1596 = vmatprep.subr.mxu0 0.0
      %1597 = vmatpush1.msra.mxu0 0.0
      %1598 = vmatprep.subr.mxu0 0.0
      %1599 = vmatpush1.msra.mxu0 0.0
      %1600 = vmatprep.subr.mxu0 0.0
      %1601 = vmatpush1.msra.mxu0 0.0
      %1602 = vmatprep.subr.mxu0 0.0
      %1603 = vmatpush1.msra.mxu0 0.0
      %1604 = vmatprep.subr.mxu0 0.0
      %1605 = vmatpush1.msra.mxu0 0.0
      %1606 = vmatprep.subr.mxu0 0.0
      %1607 = vmatpush1.msra.mxu0 0.0
      %1608 = vmatprep.subr.mxu0 0.0
      %1609 = vmatpush1.msra.mxu0 0.0
      %1610 = vmatprep.subr.mxu0 0.0
      %1611 = vmatpush1.msra.mxu0 0.0
      %1612 = vmatprep.subr.mxu0 0.0
      %1613 = vmatpush1.msra.mxu0 0.0
      %1614 = vmatprep.subr.mxu0 0.0
      %1615 = vmatpush1.msra.mxu0 0.0
      %1616 = vmatprep.subr.mxu0 0.0
      %1617 = vmatpush1.msra.mxu0 0.0
      %1618 = vmatprep.subr.mxu0 0.0
      %1619 = vmatpush1.msra.mxu0 0.0
      %1620 = vmatprep.subr.mxu0 0.0
      %1621 = vmatpush1.msra.mxu0 0.0
      %1622 = vmatprep.mubr.f32.mxu0 0.0
      %1623 = vmatmul.mubr.f32.gmra.mrb[0].mxu0 %v1529
      %v1624 = vpop.f32.mrb[0].mxu0
      %v1625 = vadd.f32 %v1556, %v1624
      %v1626 = vpop.f32.mrb[0].mxu0
      %1627 = vdwg.mxu0
      %1628 = vst [vmem:[#allocation10] sm:$0xff] %v1625
    $region37: #{tpu_custom_call.1} parent=1 // pred_fallthru
      _
    // Predicated region
    $region38: #{tpu_custom_call.1} parent=1 // pred_check
      _
    $region39: #{tpu_custom_call.1} parent=1 // pred_check_branch
      %1630 = sbr.rel (0) target = $region41
    $region40: #{tpu_custom_call.1} parent=1 // pred_region
      %s1632 = ssub.s32 128, 128
      %1633 = vsyncadd [#allocation6], %s1632
      %s1635 = sshll.u32 [#allocation10], 4
      %s1636 = int_to_ptr.vmem [resolvable:$true] %s1635
      %1638 = dma.vmem_to_hbm [thread:$0]  %s1636, 128, %s4, [#allocation6]
    $region41: #{tpu_custom_call.1} parent=1 // pred_fallthru
      _
    // Predicated region
    $region42: #{tpu_custom_call.1} parent=1 // pred_check
      _
    $region43: #{tpu_custom_call.1} parent=1 // pred_check_branch
      %1640 = sbr.rel (0) target = $region45
    $region44: #{tpu_custom_call.1} parent=1 // pred_region
      %1641 = dma.done [#allocation6], 128
    $region45: #{tpu_custom_call.1} parent=1 // pred_fallthru
      _
    %1642 = vsyncpa [#allocation5], 1
    %1643 = vsyncpa [#allocation8], 1
    %1644 = vsyncpa [#allocation6], 1

</llo_original>
